<compile_context>
chip_gen: v7x
topology: tpu7x:2x2x1
jax: 0.10.0
libtpu: 0.0.40
codegen_flags: <defaults>
</compile_context>

<pallas_src>
import functools
import math

import jax
import jax.numpy as jnp
from jax import lax
from jax.experimental import pallas as pl
from jax.experimental.pallas import tpu as pltpu


def _flash_attn_kernel(q_ref, k_ref, v_ref, o_ref, m_sc, l_sc, acc_sc, *,
                       scale, hb, head_dim, op_dtype):
    # q_ref/o_ref: (tq, hb*D) ; k_ref/v_ref: (tk, hb*D)
    # m_sc/l_sc: (tq, hb) f32 ; acc_sc: (tq, hb*D) f32
    kv = pl.program_id(3)
    D = head_dim

    @pl.when(kv == 0)
    def _init():
        m_sc[...] = jnp.full(m_sc.shape, -jnp.inf, m_sc.dtype)
        l_sc[...] = jnp.zeros(l_sc.shape, l_sc.dtype)
        acc_sc[...] = jnp.zeros(acc_sc.shape, acc_sc.dtype)

    # Static per-head loop over lane slices of the (tq, hb*D) slab.
    for h in range(hb):
        sl = slice(h * D, (h + 1) * D)

        # Fold the softmax scale into q (tq*D elements) instead of scaling the
        # (tq, tk) score tile every kv step.
        q_h = (q_ref[:, sl] * scale).astype(op_dtype)          # (tq, D)
        k_h = k_ref[:, sl].astype(op_dtype)                    # (tk, D)
        v_h = v_ref[:, sl].astype(op_dtype)                    # (tk, D)

        # Scores for this KV tile: (tq, tk), f32 accumulation on the MXU.
        s = lax.dot_general(
            q_h, k_h, (((1,), (1,)), ((), ())),
            preferred_element_type=jnp.float32)

        m_prev = m_sc[:, h:h + 1]                              # (tq, 1)
        m_new = jnp.maximum(m_prev, jnp.max(s, axis=-1, keepdims=True))
        alpha = jnp.exp(m_prev - m_new)                        # rescale old state
        p = jnp.exp(s - m_new)                                 # (tq, tk) f32

        l_sc[:, h:h + 1] = alpha * l_sc[:, h:h + 1] + jnp.sum(
            p, axis=-1, keepdims=True)
        pv = jnp.dot(p.astype(op_dtype), v_h,
                     preferred_element_type=jnp.float32)       # (tq, D) f32
        acc_sc[:, sl] = alpha * acc_sc[:, sl] + pv
        m_sc[:, h:h + 1] = m_new

    @pl.when(kv == pl.num_programs(3) - 1)
    def _finalize():
        # Exact reciprocal: runs once per q tile, negligible cost.
        inv_l = pl.reciprocal(l_sc[...], approx=False)         # (tq, hb)
        for h in range(hb):
            sl = slice(h * D, (h + 1) * D)
            acc_sc[:, sl] = acc_sc[:, sl] * inv_l[:, h:h + 1]
        # Single lane-dense store of the whole slab.
        o_ref[...] = acc_sc[...].astype(o_ref.dtype)


def _pick_tile(seq_len, target):
    """Largest tile <= target that divides seq_len and is a multiple of 8."""
    if seq_len <= target:
        return seq_len
    for t in range(min(target, seq_len), 7, -1):
        if seq_len % t == 0 and t % 8 == 0:
            return t
    return seq_len  # full-extent block is always layout-legal


def flashinfer_attention(query, key, value, *, num_heads,
                         tq=None, tk=None, hb=None, mxu_dtype="auto"):
    """query/key/value: (B, S, hidden). Returns (B, S, hidden)."""
    B, S, H = query.shape
    assert H % num_heads == 0
    D = H // num_heads
    scale = 1.0 / math.sqrt(D)

    # Head-group size: smallest group whose lane width (hb*D) is a multiple of
    # 128 (lane-dense tiles); fall back to all heads (hb*D == H, full dim).
    if hb is None:
        hb = num_heads
        for cand in range(1, num_heads + 1):
            if num_heads % cand == 0 and (cand * D) % 128 == 0:
                hb = cand
                break
    assert num_heads % hb == 0
    assert (hb * D) % 128 == 0 or hb * D == H, "head-group lane width must be lane-dense"
    G = num_heads // hb
    lane_w = hb * D

    # Sequence tiles. Bigger q tile -> K/V are re-streamed fewer times per byte
    # of MXU work; K/V kept fully resident (single kv step) for moderate S.
    if tq is None:
        tq = _pick_tile(S, 512)
    if tk is None:
        tk = S if S <= 1024 else _pick_tile(S, 512)
    assert S % tq == 0 and S % tk == 0

    # MXU operand dtype: f32 inputs go to the MXU in bf16 (accumulation stays
    # f32); pass mxu_dtype=jnp.float32 to force exact matmuls.
    if mxu_dtype == "auto":
        op_dtype = jnp.bfloat16 if query.dtype == jnp.float32 else query.dtype
    elif mxu_dtype is None:
        op_dtype = query.dtype
    else:
        op_dtype = mxu_dtype

    kernel = functools.partial(
        _flash_attn_kernel, scale=scale, hb=hb, head_dim=D, op_dtype=op_dtype)

    q_spec = pl.BlockSpec((None, tq, lane_w), lambda b, g, qi, ki: (b, qi, g))
    kv_spec = pl.BlockSpec((None, tk, lane_w), lambda b, g, qi, ki: (b, ki, g))
    o_spec = pl.BlockSpec((None, tq, lane_w), lambda b, g, qi, ki: (b, qi, g))

    # Rough VMEM estimate (double-buffered blocks + scratch + f32 s/p temps);
    # only raise the scoped limit above the conservative default if needed.
    itemsize = jnp.dtype(query.dtype).itemsize
    est = (2 * (2 * tq + 2 * tk) * lane_w * itemsize     # q, o, k, v (x2 buffers)
           + (tq * lane_w + 2 * tq * 128) * 4            # acc + lane-padded m/l
           + 2 * tq * tk * 4)                            # s / p temporaries
    vmem_limit = None
    if est > 32 * 1024 * 1024:
        vmem_limit = min(int(est * 3 // 2), 96 * 1024 * 1024)

    out = pl.pallas_call(
        kernel,
        out_shape=jax.ShapeDtypeStruct((B, S, H), query.dtype),
        grid_spec=pltpu.PrefetchScalarGridSpec(
            num_scalar_prefetch=0,
            grid=(B, G, S // tq, S // tk),
            in_specs=[q_spec, kv_spec, kv_spec],
            out_specs=o_spec,
            scratch_shapes=[
                pltpu.VMEM((tq, hb), jnp.float32),       # running max m
                pltpu.VMEM((tq, hb), jnp.float32),       # running denom l
                pltpu.VMEM((tq, lane_w), jnp.float32),   # running accumulator
            ],
        ),
        compiler_params=pltpu.CompilerParams(
            dimension_semantics=("parallel", "parallel", "parallel", "arbitrary"),
            vmem_limit_bytes=vmem_limit,
        ),
    )(query, key, value)
    return out


def _reference(query, key, value, num_heads):
    B, S, H = query.shape
    D = H // num_heads
    q = query.reshape(B, S, num_heads, D).transpose(0, 2, 1, 3)
    k = key.reshape(B, S, num_heads, D).transpose(0, 2, 1, 3)
    v = value.reshape(B, S, num_heads, D).transpose(0, 2, 1, 3)
    s = jnp.einsum("bhqd,bhkd->bhqk", q, k) / math.sqrt(D)
    w = jax.nn.softmax(s, axis=-1)
    o = jnp.einsum("bhqk,bhkd->bhqd", w, v)
    return o.transpose(0, 2, 1, 3).reshape(B, S, H)


if __name__ == "__main__":
    # Small shapes consistent with the module: hidden_dim=32, num_heads=4 -> head_dim=8
    B, S, hidden_dim, num_heads = 2, 8, 32, 4

    key0 = jax.random.PRNGKey(0)
    kq, kk, kv_ = jax.random.split(key0, 3)
    query = jax.random.normal(kq, (B, S, hidden_dim), dtype=jnp.float32)
    key_t = jax.random.normal(kk, (B, S, hidden_dim), dtype=jnp.float32)
    value = jax.random.normal(kv_, (B, S, hidden_dim), dtype=jnp.float32)

    ref = _reference(query, key_t, value, num_heads)

    # Exact path (f32 MXU operands): tight tolerance.
    out_exact = flashinfer_attention(query, key_t, value, num_heads=num_heads,
                                     mxu_dtype=jnp.float32)
    out_exact = jax.block_until_ready(out_exact)
    assert out_exact.shape == (B, S, hidden_dim)
    assert jnp.allclose(out_exact, ref, atol=1e-5, rtol=1e-5), \
        float(jnp.max(jnp.abs(out_exact - ref)))

    # Default fast path: f32 inputs are fed to the MXU in bf16 (standard
    # flash-attention practice); accumulation stays f32, so the error is
    # bounded by bf16 operand rounding.
    out = flashinfer_attention(query, key_t, value, num_heads=num_heads)
    out = jax.block_until_ready(out)
    assert out.shape == (B, S, hidden_dim)
    assert jnp.allclose(out, ref, atol=3e-2, rtol=3e-2), \
        float(jnp.max(jnp.abs(out - ref)))

    print("KERNEL_OK")
</pallas_src>

<mosaic_0001>
module attributes {stable_mosaic.version = 11 : i64} {
  func.func @_flash_attn_kernel(%arg0: i32, %arg1: i32, %arg2: i32, %arg3: i32, %arg4: memref<1x8x32xf32, #tpu.memory_space<vmem>>, %arg5: memref<1x8x32xf32, #tpu.memory_space<vmem>>, %arg6: memref<1x8x32xf32, #tpu.memory_space<vmem>>, %arg7: memref<1x8x32xf32, #tpu.memory_space<vmem>>, %arg8: memref<8x4xf32, #tpu.memory_space<vmem>>, %arg9: memref<8x4xf32, #tpu.memory_space<vmem>>, %arg10: memref<8x32xf32, #tpu.memory_space<vmem>>) attributes {dimension_semantics = [#tpu.dimension_semantics<parallel>, #tpu.dimension_semantics<parallel>, #tpu.dimension_semantics<parallel>, #tpu.dimension_semantics<arbitrary>], iteration_bounds = array<i64: 2, 1, 1, 1>, scalar_prefetch = 0 : i64, scratch_operands = 3 : i64, tpu.core_type = #tpu.core_type<tc>, window_params = [{transform_indices = @transform_0, window_bounds = array<i64: 1, 8, 32>}, {transform_indices = @transform_1, window_bounds = array<i64: 1, 8, 32>}, {transform_indices = @transform_2, window_bounds = array<i64: 1, 8, 32>}, {transform_indices = @transform_3, window_bounds = array<i64: 1, 8, 32>}]} {
    %c0_i32 = arith.constant 0 : i32
    %0 = arith.cmpi eq, %arg3, %c0_i32 : i32
    %1 = arith.extui %0 : i1 to i32
    %c0_i32_0 = arith.constant 0 : i32
    %2 = arith.cmpi ne, %1, %c0_i32_0 : i32
    scf.if %2 {
      %cst_99 = arith.constant 0xFF800000 : f32
      %130 = vector.broadcast %cst_99 : f32 to vector<8x4xf32>
      %c0_100 = arith.constant 0 : index
      %c0_101 = arith.constant 0 : index
      %131 = vector.load %arg8[%c0_100, %c0_101] : memref<8x4xf32, #tpu.memory_space<vmem>>, vector<8x4xf32>
      tpu.vector_store %arg8[%c0_100, %c0_101], %130 {strides = array<i32>} : memref<8x4xf32, #tpu.memory_space<vmem>>, vector<8x4xf32>,
      %cst_102 = arith.constant 0.000000e+00 : f32
      %132 = vector.broadcast %cst_102 : f32 to vector<8x4xf32>
      %c0_103 = arith.constant 0 : index
      %c0_104 = arith.constant 0 : index
      %133 = vector.load %arg9[%c0_103, %c0_104] : memref<8x4xf32, #tpu.memory_space<vmem>>, vector<8x4xf32>
      tpu.vector_store %arg9[%c0_103, %c0_104], %132 {strides = array<i32>} : memref<8x4xf32, #tpu.memory_space<vmem>>, vector<8x4xf32>,
      %cst_105 = arith.constant 0.000000e+00 : f32
      %134 = vector.broadcast %cst_105 : f32 to vector<8x32xf32>
      %c0_106 = arith.constant 0 : index
      %c0_107 = arith.constant 0 : index
      %135 = vector.load %arg10[%c0_106, %c0_107] : memref<8x32xf32, #tpu.memory_space<vmem>>, vector<8x32xf32>
      tpu.vector_store %arg10[%c0_106, %c0_107], %134 {strides = array<i32>} : memref<8x32xf32, #tpu.memory_space<vmem>>, vector<8x32xf32>,
    } else {
    }
    %c0 = arith.constant 0 : index
    %c0_1 = arith.constant 0 : index
    %c0_2 = arith.constant 0 : index
    %3 = vector.load %arg4[%c0, %c0_1, %c0_2] : memref<1x8x32xf32, #tpu.memory_space<vmem>>, vector<1x8x8xf32>
    %4 = vector.shape_cast %3 : vector<1x8x8xf32> to vector<8x8xf32>
    %cst = arith.constant 0.353553385 : f32
    %5 = vector.broadcast %cst : f32 to vector<8x8xf32>
    %6 = arith.mulf %4, %5 : vector<8x8xf32>
    %c0_3 = arith.constant 0 : index
    %c0_4 = arith.constant 0 : index
    %c0_5 = arith.constant 0 : index
    %7 = vector.load %arg5[%c0_3, %c0_4, %c0_5] : memref<1x8x32xf32, #tpu.memory_space<vmem>>, vector<1x8x8xf32>
    %8 = vector.shape_cast %7 : vector<1x8x8xf32> to vector<8x8xf32>
    %c0_6 = arith.constant 0 : index
    %c0_7 = arith.constant 0 : index
    %c0_8 = arith.constant 0 : index
    %9 = vector.load %arg6[%c0_6, %c0_7, %c0_8] : memref<1x8x32xf32, #tpu.memory_space<vmem>>, vector<1x8x8xf32>
    %10 = vector.shape_cast %9 : vector<1x8x8xf32> to vector<8x8xf32>
    %cst_9 = arith.constant dense<0.000000e+00> : vector<8x8xf32>
    %11 = tpu.matmul %6, %8, %cst_9 {dimension_numbers = #tpu.dot_dimension_numbers<[1], [1], [0], [0], [0, 0, 1, 0], [], []>} : vector<8x8xf32>, vector<8x8xf32>, vector<8x8xf32> -> vector<8x8xf32>
    %c0_10 = arith.constant 0 : index
    %c0_11 = arith.constant 0 : index
    %12 = vector.load %arg8[%c0_10, %c0_11] : memref<8x4xf32, #tpu.memory_space<vmem>>, vector<8x1xf32>
    %cst_12 = arith.constant dense<0xFF800000> : vector<8xf32>
    %13 = vector.multi_reduction <maximumf>, %11, %cst_12 [1] : vector<8x8xf32> to vector<8xf32>
    %14 = vector.shape_cast %13 : vector<8xf32> to vector<8x1xf32>
    %15 = arith.maximumf %12, %14 : vector<8x1xf32>
    %16 = arith.subf %12, %15 : vector<8x1xf32>
    %17 = math.exp %16 : vector<8x1xf32>
    %18 = vector.broadcast %15 : vector<8x1xf32> to vector<8x8xf32>
    %19 = arith.subf %11, %18 : vector<8x8xf32>
    %20 = math.exp %19 : vector<8x8xf32>
    %c0_13 = arith.constant 0 : index
    %c0_14 = arith.constant 0 : index
    %21 = vector.load %arg9[%c0_13, %c0_14] : memref<8x4xf32, #tpu.memory_space<vmem>>, vector<8x1xf32>
    %22 = arith.mulf %17, %21 : vector<8x1xf32>
    %cst_15 = arith.constant dense<0.000000e+00> : vector<8xf32>
    %23 = vector.multi_reduction <add>, %20, %cst_15 [1] : vector<8x8xf32> to vector<8xf32>
    %24 = vector.shape_cast %23 : vector<8xf32> to vector<8x1xf32>
    %25 = arith.addf %22, %24 : vector<8x1xf32>
    %c0_16 = arith.constant 0 : index
    %c0_17 = arith.constant 0 : index
    %26 = vector.load %arg9[%c0_16, %c0_17] : memref<8x4xf32, #tpu.memory_space<vmem>>, vector<8x1xf32>
    tpu.vector_store %arg9[%c0_16, %c0_17], %25 {strides = array<i32>} : memref<8x4xf32, #tpu.memory_space<vmem>>, vector<8x1xf32>,
    %cst_18 = arith.constant dense<0.000000e+00> : vector<8x8xf32>
    %27 = tpu.matmul %20, %10, %cst_18 {dimension_numbers = #tpu.dot_dimension_numbers<[1], [0], [0], [1], [0, 0, 1, 1], [], []>} : vector<8x8xf32>, vector<8x8xf32>, vector<8x8xf32> -> vector<8x8xf32>
    %c0_19 = arith.constant 0 : index
    %c0_20 = arith.constant 0 : index
    %28 = vector.load %arg10[%c0_19, %c0_20] : memref<8x32xf32, #tpu.memory_space<vmem>>, vector<8x8xf32>
    %29 = vector.broadcast %17 : vector<8x1xf32> to vector<8x8xf32>
    %30 = arith.mulf %29, %28 : vector<8x8xf32>
    %31 = arith.addf %30, %27 : vector<8x8xf32>
    %c0_21 = arith.constant 0 : index
    %c0_22 = arith.constant 0 : index
    %32 = vector.load %arg10[%c0_21, %c0_22] : memref<8x32xf32, #tpu.memory_space<vmem>>, vector<8x8xf32>
    tpu.vector_store %arg10[%c0_21, %c0_22], %31 {strides = array<i32>} : memref<8x32xf32, #tpu.memory_space<vmem>>, vector<8x8xf32>,
    %c0_23 = arith.constant 0 : index
    %c0_24 = arith.constant 0 : index
    %33 = vector.load %arg8[%c0_23, %c0_24] : memref<8x4xf32, #tpu.memory_space<vmem>>, vector<8x1xf32>
    tpu.vector_store %arg8[%c0_23, %c0_24], %15 {strides = array<i32>} : memref<8x4xf32, #tpu.memory_space<vmem>>, vector<8x1xf32>,
    %c0_25 = arith.constant 0 : index
    %c0_26 = arith.constant 0 : index
    %c8 = arith.constant 8 : index
    %34 = vector.load %arg4[%c0_25, %c0_26, %c8] : memref<1x8x32xf32, #tpu.memory_space<vmem>>, vector<1x8x8xf32>
    %35 = vector.shape_cast %34 : vector<1x8x8xf32> to vector<8x8xf32>
    %cst_27 = arith.constant 0.353553385 : f32
    %36 = vector.broadcast %cst_27 : f32 to vector<8x8xf32>
    %37 = arith.mulf %35, %36 : vector<8x8xf32>
    %c0_28 = arith.constant 0 : index
    %c0_29 = arith.constant 0 : index
    %c8_30 = arith.constant 8 : index
    %38 = vector.load %arg5[%c0_28, %c0_29, %c8_30] : memref<1x8x32xf32, #tpu.memory_space<vmem>>, vector<1x8x8xf32>
    %39 = vector.shape_cast %38 : vector<1x8x8xf32> to vector<8x8xf32>
    %c0_31 = arith.constant 0 : index
    %c0_32 = arith.constant 0 : index
    %c8_33 = arith.constant 8 : index
    %40 = vector.load %arg6[%c0_31, %c0_32, %c8_33] : memref<1x8x32xf32, #tpu.memory_space<vmem>>, vector<1x8x8xf32>
    %41 = vector.shape_cast %40 : vector<1x8x8xf32> to vector<8x8xf32>
    %cst_34 = arith.constant dense<0.000000e+00> : vector<8x8xf32>
    %42 = tpu.matmul %37, %39, %cst_34 {dimension_numbers = #tpu.dot_dimension_numbers<[1], [1], [0], [0], [0, 0, 1, 0], [], []>} : vector<8x8xf32>, vector<8x8xf32>, vector<8x8xf32> -> vector<8x8xf32>
    %c0_35 = arith.constant 0 : index
    %c1 = arith.constant 1 : index
    %43 = vector.load %arg8[%c0_35, %c1] : memref<8x4xf32, #tpu.memory_space<vmem>>, vector<8x1xf32>
    %cst_36 = arith.constant dense<0xFF800000> : vector<8xf32>
    %44 = vector.multi_reduction <maximumf>, %42, %cst_36 [1] : vector<8x8xf32> to vector<8xf32>
    %45 = vector.shape_cast %44 : vector<8xf32> to vector<8x1xf32>
    %46 = arith.maximumf %43, %45 : vector<8x1xf32>
    %47 = arith.subf %43, %46 : vector<8x1xf32>
    %48 = math.exp %47 : vector<8x1xf32>
    %49 = vector.broadcast %46 : vector<8x1xf32> to vector<8x8xf32>
    %50 = arith.subf %42, %49 : vector<8x8xf32>
    %51 = math.exp %50 : vector<8x8xf32>
    %c0_37 = arith.constant 0 : index
    %c1_38 = arith.constant 1 : index
    %52 = vector.load %arg9[%c0_37, %c1_38] : memref<8x4xf32, #tpu.memory_space<vmem>>, vector<8x1xf32>
    %53 = arith.mulf %48, %52 : vector<8x1xf32>
    %cst_39 = arith.constant dense<0.000000e+00> : vector<8xf32>
    %54 = vector.multi_reduction <add>, %51, %cst_39 [1] : vector<8x8xf32> to vector<8xf32>
    %55 = vector.shape_cast %54 : vector<8xf32> to vector<8x1xf32>
    %56 = arith.addf %53, %55 : vector<8x1xf32>
    %c0_40 = arith.constant 0 : index
    %c1_41 = arith.constant 1 : index
    %57 = vector.load %arg9[%c0_40, %c1_41] : memref<8x4xf32, #tpu.memory_space<vmem>>, vector<8x1xf32>
    tpu.vector_store %arg9[%c0_40, %c1_41], %56 {strides = array<i32>} : memref<8x4xf32, #tpu.memory_space<vmem>>, vector<8x1xf32>,
    %cst_42 = arith.constant dense<0.000000e+00> : vector<8x8xf32>
    %58 = tpu.matmul %51, %41, %cst_42 {dimension_numbers = #tpu.dot_dimension_numbers<[1], [0], [0], [1], [0, 0, 1, 1], [], []>} : vector<8x8xf32>, vector<8x8xf32>, vector<8x8xf32> -> vector<8x8xf32>
    %c0_43 = arith.constant 0 : index
    %c8_44 = arith.constant 8 : index
    %59 = vector.load %arg10[%c0_43, %c8_44] : memref<8x32xf32, #tpu.memory_space<vmem>>, vector<8x8xf32>
    %60 = vector.broadcast %48 : vector<8x1xf32> to vector<8x8xf32>
    %61 = arith.mulf %60, %59 : vector<8x8xf32>
    %62 = arith.addf %61, %58 : vector<8x8xf32>
    %c0_45 = arith.constant 0 : index
    %c8_46 = arith.constant 8 : index
    %63 = vector.load %arg10[%c0_45, %c8_46] : memref<8x32xf32, #tpu.memory_space<vmem>>, vector<8x8xf32>
    tpu.vector_store %arg10[%c0_45, %c8_46], %62 {strides = array<i32>} : memref<8x32xf32, #tpu.memory_space<vmem>>, vector<8x8xf32>,
    %c0_47 = arith.constant 0 : index
    %c1_48 = arith.constant 1 : index
    %64 = vector.load %arg8[%c0_47, %c1_48] : memref<8x4xf32, #tpu.memory_space<vmem>>, vector<8x1xf32>
    tpu.vector_store %arg8[%c0_47, %c1_48], %46 {strides = array<i32>} : memref<8x4xf32, #tpu.memory_space<vmem>>, vector<8x1xf32>,
    %c0_49 = arith.constant 0 : index
    %c0_50 = arith.constant 0 : index
    %c16 = arith.constant 16 : index
    %65 = vector.load %arg4[%c0_49, %c0_50, %c16] : memref<1x8x32xf32, #tpu.memory_space<vmem>>, vector<1x8x8xf32>
    %66 = vector.shape_cast %65 : vector<1x8x8xf32> to vector<8x8xf32>
    %cst_51 = arith.constant 0.353553385 : f32
    %67 = vector.broadcast %cst_51 : f32 to vector<8x8xf32>
    %68 = arith.mulf %66, %67 : vector<8x8xf32>
    %c0_52 = arith.constant 0 : index
    %c0_53 = arith.constant 0 : index
    %c16_54 = arith.constant 16 : index
    %69 = vector.load %arg5[%c0_52, %c0_53, %c16_54] : memref<1x8x32xf32, #tpu.memory_space<vmem>>, vector<1x8x8xf32>
    %70 = vector.shape_cast %69 : vector<1x8x8xf32> to vector<8x8xf32>
    %c0_55 = arith.constant 0 : index
    %c0_56 = arith.constant 0 : index
    %c16_57 = arith.constant 16 : index
    %71 = vector.load %arg6[%c0_55, %c0_56, %c16_57] : memref<1x8x32xf32, #tpu.memory_space<vmem>>, vector<1x8x8xf32>
    %72 = vector.shape_cast %71 : vector<1x8x8xf32> to vector<8x8xf32>
    %cst_58 = arith.constant dense<0.000000e+00> : vector<8x8xf32>
    %73 = tpu.matmul %68, %70, %cst_58 {dimension_numbers = #tpu.dot_dimension_numbers<[1], [1], [0], [0], [0, 0, 1, 0], [], []>} : vector<8x8xf32>, vector<8x8xf32>, vector<8x8xf32> -> vector<8x8xf32>
    %c0_59 = arith.constant 0 : index
    %c2 = arith.constant 2 : index
    %74 = vector.load %arg8[%c0_59, %c2] : memref<8x4xf32, #tpu.memory_space<vmem>>, vector<8x1xf32>
    %cst_60 = arith.constant dense<0xFF800000> : vector<8xf32>
    %75 = vector.multi_reduction <maximumf>, %73, %cst_60 [1] : vector<8x8xf32> to vector<8xf32>
    %76 = vector.shape_cast %75 : vector<8xf32> to vector<8x1xf32>
    %77 = arith.maximumf %74, %76 : vector<8x1xf32>
    %78 = arith.subf %74, %77 : vector<8x1xf32>
    %79 = math.exp %78 : vector<8x1xf32>
    %80 = vector.broadcast %77 : vector<8x1xf32> to vector<8x8xf32>
    %81 = arith.subf %73, %80 : vector<8x8xf32>
    %82 = math.exp %81 : vector<8x8xf32>
    %c0_61 = arith.constant 0 : index
    %c2_62 = arith.constant 2 : index
    %83 = vector.load %arg9[%c0_61, %c2_62] : memref<8x4xf32, #tpu.memory_space<vmem>>, vector<8x1xf32>
    %84 = arith.mulf %79, %83 : vector<8x1xf32>
    %cst_63 = arith.constant dense<0.000000e+00> : vector<8xf32>
    %85 = vector.multi_reduction <add>, %82, %cst_63 [1] : vector<8x8xf32> to vector<8xf32>
    %86 = vector.shape_cast %85 : vector<8xf32> to vector<8x1xf32>
    %87 = arith.addf %84, %86 : vector<8x1xf32>
    %c0_64 = arith.constant 0 : index
    %c2_65 = arith.constant 2 : index
    %88 = vector.load %arg9[%c0_64, %c2_65] : memref<8x4xf32, #tpu.memory_space<vmem>>, vector<8x1xf32>
    tpu.vector_store %arg9[%c0_64, %c2_65], %87 {strides = array<i32>} : memref<8x4xf32, #tpu.memory_space<vmem>>, vector<8x1xf32>,
    %cst_66 = arith.constant dense<0.000000e+00> : vector<8x8xf32>
    %89 = tpu.matmul %82, %72, %cst_66 {dimension_numbers = #tpu.dot_dimension_numbers<[1], [0], [0], [1], [0, 0, 1, 1], [], []>} : vector<8x8xf32>, vector<8x8xf32>, vector<8x8xf32> -> vector<8x8xf32>
    %c0_67 = arith.constant 0 : index
    %c16_68 = arith.constant 16 : index
    %90 = vector.load %arg10[%c0_67, %c16_68] : memref<8x32xf32, #tpu.memory_space<vmem>>, vector<8x8xf32>
    %91 = vector.broadcast %79 : vector<8x1xf32> to vector<8x8xf32>
    %92 = arith.mulf %91, %90 : vector<8x8xf32>
    %93 = arith.addf %92, %89 : vector<8x8xf32>
    %c0_69 = arith.constant 0 : index
    %c16_70 = arith.constant 16 : index
    %94 = vector.load %arg10[%c0_69, %c16_70] : memref<8x32xf32, #tpu.memory_space<vmem>>, vector<8x8xf32>
    tpu.vector_store %arg10[%c0_69, %c16_70], %93 {strides = array<i32>} : memref<8x32xf32, #tpu.memory_space<vmem>>, vector<8x8xf32>,
    %c0_71 = arith.constant 0 : index
    %c2_72 = arith.constant 2 : index
    %95 = vector.load %arg8[%c0_71, %c2_72] : memref<8x4xf32, #tpu.memory_space<vmem>>, vector<8x1xf32>
    tpu.vector_store %arg8[%c0_71, %c2_72], %77 {strides = array<i32>} : memref<8x4xf32, #tpu.memory_space<vmem>>, vector<8x1xf32>,
    %c0_73 = arith.constant 0 : index
    %c0_74 = arith.constant 0 : index
    %c24 = arith.constant 24 : index
    %96 = vector.load %arg4[%c0_73, %c0_74, %c24] : memref<1x8x32xf32, #tpu.memory_space<vmem>>, vector<1x8x8xf32>
    %97 = vector.shape_cast %96 : vector<1x8x8xf32> to vector<8x8xf32>
    %cst_75 = arith.constant 0.353553385 : f32
    %98 = vector.broadcast %cst_75 : f32 to vector<8x8xf32>
    %99 = arith.mulf %97, %98 : vector<8x8xf32>
    %c0_76 = arith.constant 0 : index
    %c0_77 = arith.constant 0 : index
    %c24_78 = arith.constant 24 : index
    %100 = vector.load %arg5[%c0_76, %c0_77, %c24_78] : memref<1x8x32xf32, #tpu.memory_space<vmem>>, vector<1x8x8xf32>
    %101 = vector.shape_cast %100 : vector<1x8x8xf32> to vector<8x8xf32>
    %c0_79 = arith.constant 0 : index
    %c0_80 = arith.constant 0 : index
    %c24_81 = arith.constant 24 : index
    %102 = vector.load %arg6[%c0_79, %c0_80, %c24_81] : memref<1x8x32xf32, #tpu.memory_space<vmem>>, vector<1x8x8xf32>
    %103 = vector.shape_cast %102 : vector<1x8x8xf32> to vector<8x8xf32>
    %cst_82 = arith.constant dense<0.000000e+00> : vector<8x8xf32>
    %104 = tpu.matmul %99, %101, %cst_82 {dimension_numbers = #tpu.dot_dimension_numbers<[1], [1], [0], [0], [0, 0, 1, 0], [], []>} : vector<8x8xf32>, vector<8x8xf32>, vector<8x8xf32> -> vector<8x8xf32>
    %c0_83 = arith.constant 0 : index
    %c3 = arith.constant 3 : index
    %105 = vector.load %arg8[%c0_83, %c3] : memref<8x4xf32, #tpu.memory_space<vmem>>, vector<8x1xf32>
    %cst_84 = arith.constant dense<0xFF800000> : vector<8xf32>
    %106 = vector.multi_reduction <maximumf>, %104, %cst_84 [1] : vector<8x8xf32> to vector<8xf32>
    %107 = vector.shape_cast %106 : vector<8xf32> to vector<8x1xf32>
    %108 = arith.maximumf %105, %107 : vector<8x1xf32>
    %109 = arith.subf %105, %108 : vector<8x1xf32>
    %110 = math.exp %109 : vector<8x1xf32>
    %111 = vector.broadcast %108 : vector<8x1xf32> to vector<8x8xf32>
    %112 = arith.subf %104, %111 : vector<8x8xf32>
    %113 = math.exp %112 : vector<8x8xf32>
    %c0_85 = arith.constant 0 : index
    %c3_86 = arith.constant 3 : index
    %114 = vector.load %arg9[%c0_85, %c3_86] : memref<8x4xf32, #tpu.memory_space<vmem>>, vector<8x1xf32>
    %115 = arith.mulf %110, %114 : vector<8x1xf32>
    %cst_87 = arith.constant dense<0.000000e+00> : vector<8xf32>
    %116 = vector.multi_reduction <add>, %113, %cst_87 [1] : vector<8x8xf32> to vector<8xf32>
    %117 = vector.shape_cast %116 : vector<8xf32> to vector<8x1xf32>
    %118 = arith.addf %115, %117 : vector<8x1xf32>
    %c0_88 = arith.constant 0 : index
    %c3_89 = arith.constant 3 : index
    %119 = vector.load %arg9[%c0_88, %c3_89] : memref<8x4xf32, #tpu.memory_space<vmem>>, vector<8x1xf32>
    tpu.vector_store %arg9[%c0_88, %c3_89], %118 {strides = array<i32>} : memref<8x4xf32, #tpu.memory_space<vmem>>, vector<8x1xf32>,
    %cst_90 = arith.constant dense<0.000000e+00> : vector<8x8xf32>
    %120 = tpu.matmul %113, %103, %cst_90 {dimension_numbers = #tpu.dot_dimension_numbers<[1], [0], [0], [1], [0, 0, 1, 1], [], []>} : vector<8x8xf32>, vector<8x8xf32>, vector<8x8xf32> -> vector<8x8xf32>
    %c0_91 = arith.constant 0 : index
    %c24_92 = arith.constant 24 : index
    %121 = vector.load %arg10[%c0_91, %c24_92] : memref<8x32xf32, #tpu.memory_space<vmem>>, vector<8x8xf32>
    %122 = vector.broadcast %110 : vector<8x1xf32> to vector<8x8xf32>
    %123 = arith.mulf %122, %121 : vector<8x8xf32>
    %124 = arith.addf %123, %120 : vector<8x8xf32>
    %c0_93 = arith.constant 0 : index
    %c24_94 = arith.constant 24 : index
    %125 = vector.load %arg10[%c0_93, %c24_94] : memref<8x32xf32, #tpu.memory_space<vmem>>, vector<8x8xf32>
    tpu.vector_store %arg10[%c0_93, %c24_94], %124 {strides = array<i32>} : memref<8x32xf32, #tpu.memory_space<vmem>>, vector<8x8xf32>,
    %c0_95 = arith.constant 0 : index
    %c3_96 = arith.constant 3 : index
    %126 = vector.load %arg8[%c0_95, %c3_96] : memref<8x4xf32, #tpu.memory_space<vmem>>, vector<8x1xf32>
    tpu.vector_store %arg8[%c0_95, %c3_96], %108 {strides = array<i32>} : memref<8x4xf32, #tpu.memory_space<vmem>>, vector<8x1xf32>,
    %c0_i32_97 = arith.constant 0 : i32
    %127 = arith.cmpi eq, %arg3, %c0_i32_97 : i32
    %128 = arith.extui %127 : i1 to i32
    %c0_i32_98 = arith.constant 0 : i32
    %129 = arith.cmpi ne, %128, %c0_i32_98 : i32
    scf.if %129 {
      %c0_99 = arith.constant 0 : index
      %c0_100 = arith.constant 0 : index
      %130 = vector.load %arg9[%c0_99, %c0_100] : memref<8x4xf32, #tpu.memory_space<vmem>>, vector<8x4xf32>
      %131 = tpu.reciprocal %130 : vector<8x4xf32> -> vector<8x4xf32>
      %c0_101 = arith.constant 0 : index
      %c0_102 = arith.constant 0 : index
      %132 = vector.load %arg10[%c0_101, %c0_102] : memref<8x32xf32, #tpu.memory_space<vmem>>, vector<8x8xf32>
      %133 = vector.extract_strided_slice %131 {offsets = [0, 0], sizes = [8, 1], strides = [1, 1]} : vector<8x4xf32> to vector<8x1xf32>
      %134 = vector.broadcast %133 : vector<8x1xf32> to vector<8x8xf32>
      %135 = arith.mulf %132, %134 : vector<8x8xf32>
      %c0_103 = arith.constant 0 : index
      %c0_104 = arith.constant 0 : index
      %136 = vector.load %arg10[%c0_103, %c0_104] : memref<8x32xf32, #tpu.memory_space<vmem>>, vector<8x8xf32>
      tpu.vector_store %arg10[%c0_103, %c0_104], %135 {strides = array<i32>} : memref<8x32xf32, #tpu.memory_space<vmem>>, vector<8x8xf32>,
      %c0_105 = arith.constant 0 : index
      %c8_106 = arith.constant 8 : index
      %137 = vector.load %arg10[%c0_105, %c8_106] : memref<8x32xf32, #tpu.memory_space<vmem>>, vector<8x8xf32>
      %138 = vector.extract_strided_slice %131 {offsets = [0, 1], sizes = [8, 1], strides = [1, 1]} : vector<8x4xf32> to vector<8x1xf32>
      %139 = vector.broadcast %138 : vector<8x1xf32> to vector<8x8xf32>
      %140 = arith.mulf %137, %139 : vector<8x8xf32>
      %c0_107 = arith.constant 0 : index
      %c8_108 = arith.constant 8 : index
      %141 = vector.load %arg10[%c0_107, %c8_108] : memref<8x32xf32, #tpu.memory_space<vmem>>, vector<8x8xf32>
      tpu.vector_store %arg10[%c0_107, %c8_108], %140 {strides = array<i32>} : memref<8x32xf32, #tpu.memory_space<vmem>>, vector<8x8xf32>,
      %c0_109 = arith.constant 0 : index
      %c16_110 = arith.constant 16 : index
      %142 = vector.load %arg10[%c0_109, %c16_110] : memref<8x32xf32, #tpu.memory_space<vmem>>, vector<8x8xf32>
      %143 = vector.extract_strided_slice %131 {offsets = [0, 2], sizes = [8, 1], strides = [1, 1]} : vector<8x4xf32> to vector<8x1xf32>
      %144 = vector.broadcast %143 : vector<8x1xf32> to vector<8x8xf32>
      %145 = arith.mulf %142, %144 : vector<8x8xf32>
      %c0_111 = arith.constant 0 : index
      %c16_112 = arith.constant 16 : index
      %146 = vector.load %arg10[%c0_111, %c16_112] : memref<8x32xf32, #tpu.memory_space<vmem>>, vector<8x8xf32>
      tpu.vector_store %arg10[%c0_111, %c16_112], %145 {strides = array<i32>} : memref<8x32xf32, #tpu.memory_space<vmem>>, vector<8x8xf32>,
      %c0_113 = arith.constant 0 : index
      %c24_114 = arith.constant 24 : index
      %147 = vector.load %arg10[%c0_113, %c24_114] : memref<8x32xf32, #tpu.memory_space<vmem>>, vector<8x8xf32>
      %148 = vector.extract_strided_slice %131 {offsets = [0, 3], sizes = [8, 1], strides = [1, 1]} : vector<8x4xf32> to vector<8x1xf32>
      %149 = vector.broadcast %148 : vector<8x1xf32> to vector<8x8xf32>
      %150 = arith.mulf %147, %149 : vector<8x8xf32>
      %c0_115 = arith.constant 0 : index
      %c24_116 = arith.constant 24 : index
      %151 = vector.load %arg10[%c0_115, %c24_116] : memref<8x32xf32, #tpu.memory_space<vmem>>, vector<8x8xf32>
      tpu.vector_store %arg10[%c0_115, %c24_116], %150 {strides = array<i32>} : memref<8x32xf32, #tpu.memory_space<vmem>>, vector<8x8xf32>,
      %c0_117 = arith.constant 0 : index
      %c0_118 = arith.constant 0 : index
      %152 = vector.load %arg10[%c0_117, %c0_118] : memref<8x32xf32, #tpu.memory_space<vmem>>, vector<8x32xf32>
      %c0_119 = arith.constant 0 : index
      %c0_120 = arith.constant 0 : index
      %c0_121 = arith.constant 0 : index
      %153 = vector.load %arg7[%c0_119, %c0_120, %c0_121] : memref<1x8x32xf32, #tpu.memory_space<vmem>>, vector<1x8x32xf32>
      %154 = vector.shape_cast %153 : vector<1x8x32xf32> to vector<8x32xf32>
      %155 = vector.shape_cast %152 : vector<8x32xf32> to vector<1x8x32xf32>
      tpu.vector_store %arg7[%c0_119, %c0_120, %c0_121], %155 {strides = array<i32>} : memref<1x8x32xf32, #tpu.memory_space<vmem>>, vector<1x8x32xf32>,
    } else {
    }
    return
  }
  func.func @transform_0(%arg0: i32, %arg1: i32, %arg2: i32, %arg3: i32) -> (i32, i32, i32) {
    %c0_i32 = arith.constant 0 : i32
    return %arg0, %arg2, %arg1 : i32, i32, i32
  }
  func.func @transform_1(%arg0: i32, %arg1: i32, %arg2: i32, %arg3: i32) -> (i32, i32, i32) {
    %c0_i32 = arith.constant 0 : i32
    return %arg0, %arg3, %arg1 : i32, i32, i32
  }
  func.func @transform_2(%arg0: i32, %arg1: i32, %arg2: i32, %arg3: i32) -> (i32, i32, i32) {
    %c0_i32 = arith.constant 0 : i32
    return %arg0, %arg3, %arg1 : i32, i32, i32
  }
  func.func @transform_3(%arg0: i32, %arg1: i32, %arg2: i32, %arg3: i32) -> (i32, i32, i32) {
    %c0_i32 = arith.constant 0 : i32
    return %arg0, %arg2, %arg1 : i32, i32, i32
  }
}

</mosaic_0001>

<llo_original>
// kernel: tpu_custom_call.1
$region0: #{tpu_custom_call.1}
  #allocation0 [shape = 'u32[]', space=smem, size = 0x4, offset = 0x4, fixed_abs, tag = 'smem constant byte address 0x4 - core index']
  #allocation1 [shape = 'u32[144,128]{1,0:T(1,128)}', space=vmem, size = 0x12000, scoped, tag = 'internal scratch']
  #allocation2 [shape = 'f32[8,4]{1,0:T(8,128)}', space=vmem, size = 0x1000, scoped, tag = 'scratch operand']
  #allocation3 [shape = 'f32[8,4]{1,0:T(8,128)}', space=vmem, size = 0x1000, scoped, tag = 'scratch operand']
  #allocation4 [shape = 'f32[8,32]{1,0:T(8,128)}', space=vmem, size = 0x1000, scoped, tag = 'scratch operand']
  %s0 = inlined_call_operand.hbm [shape: f32[2,8,32], index: 0, kind: input, shape index: {}]
  %s1 = inlined_call_operand.hbm [shape: f32[2,8,32], index: 1, kind: input, shape index: {}]
  %s2 = inlined_call_operand.hbm [shape: f32[2,8,32], index: 2, kind: input, shape index: {}]
  %s3 = inlined_call_operand.hbm [shape: f32[2,8,32], index: 3, kind: output, shape index: {}]
  %s4 = sld [smem:[#allocation0]]
  $region65: #{tpu_custom_call.1} parent=0
    _
  %s6 = ssub.s32 1, %s4
  %s7 = scalar_select 0, %s6, %s4
  $region1: #{tpu_custom_call.1} parent=0
    #allocation5 [shape = 'u8[8192]{0}', space=vmem, size = 0x2000, scoped, tag = 'input window, operand 0']
    #allocation6 [shape = 's32[2]{0}', space=sflag, size = 0x8, scoped, tag = 'scoped memory for tpu_custom_call.1']
    #allocation7 [shape = 's32[2]{0}', space=sflag, size = 0x8, scoped, tag = 'scoped memory for tpu_custom_call.1']
    #allocation8 [shape = 'u8[8192]{0}', space=vmem, size = 0x2000, scoped, tag = 'input window, operand 1']
    #allocation9 [shape = 's32[2]{0}', space=sflag, size = 0x8, scoped, tag = 'scoped memory for tpu_custom_call.1']
    #allocation10 [shape = 'u8[8192]{0}', space=vmem, size = 0x2000, scoped, tag = 'input window, operand 2']
    #allocation11 [shape = 'u8[8192]{0}', space=vmem, size = 0x2000, scoped, tag = 'output window, operand 0']
    %8 = vsyncpa [#allocation6], 0
    %s9 = scalar_lea.sflag [#allocation6], 1
    %10 = vsyncpa %s9, 0
    %11 = vsyncpa [#allocation9], 0
    %s12 = scalar_lea.sflag [#allocation9], 1
    %13 = vsyncpa %s12, 0
    %14 = vsyncpa [#allocation7], 0
    %s15 = scalar_lea.sflag [#allocation7], 1
    %16 = vsyncpa %s15, 0
    loop: start=0, step=1, limit=4
    $region2: #{tpu_custom_call.1} parent=1 // loop_pre_header
      _
    $region3: #{tpu_custom_call.1} parent=1 // loop_header
      %s18 = sphi 0, %s22
      %p19 = scmp.ge.s32.totalorder %s18, 4
      %s25 = sphi 0, %s51
      %s26 = sphi 0, %s47
      %s27 = sphi 0, %s43
      %s28 = sphi 0, %s39
      %s29 = sphi 0, %s25
      %s30 = sphi 0, %s26
      %s31 = sphi 0, %s27
      %s32 = sphi 0, %s28
      %s33 = sphi 0, %s29
      %s34 = sphi 0, %s30
      %s35 = sphi 0, %s31
      %s36 = sphi 0, %s32
      %s58 = sphi 0, %s60
      %s61 = sphi 0, %s58
      %s62 = sphi 0, %s61
      %s78 = sphi 0, %s62
      %s88 = sphi 0, %s90
      %s91 = sphi 0, %s88
      %s92 = sphi 0, %s91
      %s108 = sphi 0, %s92
      %s118 = sphi 0, %s120
      %s121 = sphi 0, %s118
      %s122 = sphi 0, %s121
      %s138 = sphi 0, %s122
      %s148 = sphi 0, %s150
      %s151 = sphi 0, %s148
      %s152 = sphi 0, %s151
      %s168 = sphi 0, %s152
    $region4: #{tpu_custom_call.1} parent=1 // loop_header_branch
      %21 = sbr.rel (%p19) target = $region8
    $region5: #{tpu_custom_call.1} parent=1 // loop_body
      %s23 = ssub.s32 %s18, 1
      %s24 = ssub.s32 %s18, 2
      %s37 = sadd.s32 1, %s28
      %p38 = scmp.ge.s32.totalorder %s37, 1
      %s39 = scalar_select %p38, 0, %s37
      %s40 = sadd.s32 1, %s27
      %s41 = scalar_select %p38, %s40, %s27
      %p42 = scmp.ge.s32.totalorder %s41, 1
      %s43 = scalar_select %p42, 0, %s41
      %s44 = sadd.s32 1, %s26
      %s45 = scalar_select %p42, %s44, %s26
      %p46 = scmp.ge.s32.totalorder %s45, 1
      %s47 = scalar_select %p46, 0, %s45
      %s48 = sadd.s32 1, %s25
      %s49 = scalar_select %p46, %s48, %s25
      %p50 = scmp.ge.s32.totalorder %s49, 2
      %s51 = scalar_select %p50, 0, %s49
      %s52 = ssub.s32 %s25, %s51
      %s53 = ssub.s32 %s27, %s43
      %s54 = sor.u32 %s52, %s53
      %s55 = ssub.s32 %s26, %s47
      %s56 = sor.u32 %s54, %s55
      %p57 = scmp.eq.s32.totalorder %s56, 0
      %s59 = sadd.s32 %s58, 1
      %s60 = scalar_select %p57, %s58, %s59
      %p63 = pneg %p57
      %p64 = scmp.eq.s32.totalorder %s18, 1
      %p65 = por %p63, %p64
      %p66 = scmp.ne.s32.totalorder %s58, %s61
      %p67 = scmp.eq.s32.totalorder %s18, 0
      %p68 = por %p66, %p67
      %p69 = scmp.ne.s32.totalorder %s58, %s61
      %p70 = scmp.eq.s32.totalorder %s23, 1
      %p71 = por %p69, %p70
      %p72 = scmp.ne.s32.totalorder %s61, %s62
      %p73 = scmp.eq.s32.totalorder %s23, 0
      %p74 = por %p72, %p73
      %p75 = scmp.ne.s32.totalorder %s61, %s62
      %p76 = scmp.eq.s32.totalorder %s24, 1
      %p77 = por %p75, %p76
      %p79 = scmp.ne.s32.totalorder %s62, %s78
      %p80 = scmp.eq.s32.totalorder %s24, 0
      %p81 = por %p79, %p80
      %s82 = ssub.s32 %s25, %s51
      %s83 = ssub.s32 %s28, %s39
      %s84 = sor.u32 %s82, %s83
      %s85 = ssub.s32 %s26, %s47
      %s86 = sor.u32 %s84, %s85
      %p87 = scmp.eq.s32.totalorder %s86, 0
      %s89 = sadd.s32 %s88, 1
      %s90 = scalar_select %p87, %s88, %s89
      %p93 = pneg %p87
      %p94 = scmp.eq.s32.totalorder %s18, 1
      %p95 = por %p93, %p94
      %p96 = scmp.ne.s32.totalorder %s88, %s91
      %p97 = scmp.eq.s32.totalorder %s18, 0
      %p98 = por %p96, %p97
      %p99 = scmp.ne.s32.totalorder %s88, %s91
      %p100 = scmp.eq.s32.totalorder %s23, 1
      %p101 = por %p99, %p100
      %p102 = scmp.ne.s32.totalorder %s91, %s92
      %p103 = scmp.eq.s32.totalorder %s23, 0
      %p104 = por %p102, %p103
      %p105 = scmp.ne.s32.totalorder %s91, %s92
      %p106 = scmp.eq.s32.totalorder %s24, 1
      %p107 = por %p105, %p106
      %p109 = scmp.ne.s32.totalorder %s92, %s108
      %p110 = scmp.eq.s32.totalorder %s24, 0
      %p111 = por %p109, %p110
      %s112 = ssub.s32 %s25, %s51
      %s113 = ssub.s32 %s28, %s39
      %s114 = sor.u32 %s112, %s113
      %s115 = ssub.s32 %s26, %s47
      %s116 = sor.u32 %s114, %s115
      %p117 = scmp.eq.s32.totalorder %s116, 0
      %s119 = sadd.s32 %s118, 1
      %s120 = scalar_select %p117, %s118, %s119
      %p123 = pneg %p117
      %p124 = scmp.eq.s32.totalorder %s18, 1
      %p125 = por %p123, %p124
      %p126 = scmp.ne.s32.totalorder %s118, %s121
      %p127 = scmp.eq.s32.totalorder %s18, 0
      %p128 = por %p126, %p127
      %p129 = scmp.ne.s32.totalorder %s118, %s121
      %p130 = scmp.eq.s32.totalorder %s23, 1
      %p131 = por %p129, %p130
      %p132 = scmp.ne.s32.totalorder %s121, %s122
      %p133 = scmp.eq.s32.totalorder %s23, 0
      %p134 = por %p132, %p133
      %p135 = scmp.ne.s32.totalorder %s121, %s122
      %p136 = scmp.eq.s32.totalorder %s24, 1
      %p137 = por %p135, %p136
      %p139 = scmp.ne.s32.totalorder %s122, %s138
      %p140 = scmp.eq.s32.totalorder %s24, 0
      %p141 = por %p139, %p140
      %s142 = ssub.s32 %s25, %s51
      %s143 = ssub.s32 %s27, %s43
      %s144 = sor.u32 %s142, %s143
      %s145 = ssub.s32 %s26, %s47
      %s146 = sor.u32 %s144, %s145
      %p147 = scmp.eq.s32.totalorder %s146, 0
      %s149 = sadd.s32 %s148, 1
      %s150 = scalar_select %p147, %s148, %s149
      %p153 = pneg %p147
      %p154 = scmp.eq.s32.totalorder %s18, 1
      %p155 = por %p153, %p154
      %p156 = scmp.ne.s32.totalorder %s148, %s151
      %p157 = scmp.eq.s32.totalorder %s18, 0
      %p158 = por %p156, %p157
      %p159 = scmp.ne.s32.totalorder %s148, %s151
      %p160 = scmp.eq.s32.totalorder %s23, 1
      %p161 = por %p159, %p160
      %p162 = scmp.ne.s32.totalorder %s151, %s152
      %p163 = scmp.eq.s32.totalorder %s23, 0
      %p164 = por %p162, %p163
      %p165 = scmp.ne.s32.totalorder %s151, %s152
      %p166 = scmp.eq.s32.totalorder %s24, 1
      %p167 = por %p165, %p166
      %p169 = scmp.ne.s32.totalorder %s152, %s168
      %p170 = scmp.eq.s32.totalorder %s24, 0
      %p171 = por %p169, %p170
      %p172 = scmp.le.s32.totalorder 1, %s18
      %p173 = scmp.lt.s32.totalorder %s18, 3
      %p174 = pnand %p172, %p173
      %p175 = pneg %p174
      // Predicated region
      $region9: #{tpu_custom_call.1} parent=5 // pred_check
        _
      $region10: #{tpu_custom_call.1} parent=5 // pred_check_branch
        %177 = sbr.rel (%p174) target = $region12
      $region11: #{tpu_custom_call.1} parent=5 // pred_region
        %s178 = ssub.s32 %s18, 1
      $region12: #{tpu_custom_call.1} parent=5 // pred_fallthru
        _
      %p179 = scmp.lt.s32.totalorder %s18, 2
      // Predicated region
      $region13: #{tpu_custom_call.1} parent=5 // pred_check
        %p180 = pneg %p179
      $region14: #{tpu_custom_call.1} parent=5 // pred_check_branch
        %182 = sbr.rel (%p180) target = $region16
      $region15: #{tpu_custom_call.1} parent=5 // pred_region
        // Predicated region
        $region17: #{tpu_custom_call.1} parent=15 // pred_check
          %p183 = pneg %p68
        $region18: #{tpu_custom_call.1} parent=15 // pred_check_branch
          %185 = sbr.rel (%p183) target = $region20
        $region19: #{tpu_custom_call.1} parent=15 // pred_region
          %s186 = sand.u32 %s58, 1
          %s187 = scalar_lea.sflag [#allocation6], %s186
          %s188 = sand.u32 %s58, 1
          %s189 = smul.addr %s188, 8
          %s190 = scalar_lea.vmem [#allocation5], %s189
          %s192 = ssub.s32 128, 128
          %193 = vsyncadd %s187, %s192
          %s194 = sadd.s32 %s26, %s27
          %s195 = sadd.s32 %s194, %s25
          %s196 = smul.addr %s195, 128
          %s197 = scalar_lea.hbm %s0, %s196
          %s199 = sshll.u32 %s190, 4
          %s200 = int_to_ptr.vmem [resolvable:$true] %s199
          %202 = dma.hbm_to_vmem [thread:$0]  %s197, 128, %s200, %s187
        $region20: #{tpu_custom_call.1} parent=15 // pred_fallthru
          _
        // Predicated region
        $region21: #{tpu_custom_call.1} parent=15 // pred_check
          %p203 = pneg %p98
        $region22: #{tpu_custom_call.1} parent=15 // pred_check_branch
          %205 = sbr.rel (%p203) target = $region24
        $region23: #{tpu_custom_call.1} parent=15 // pred_region
          %s206 = sand.u32 %s18, 1
          %s207 = scalar_lea.sflag [#allocation9], %s206
          %s208 = sand.u32 %s88, 1
          %s209 = smul.addr %s208, 8
          %s210 = scalar_lea.vmem [#allocation8], %s209
          %s212 = ssub.s32 128, 128
          %213 = vsyncadd %s207, %s212
          %s214 = sadd.s32 %s26, %s28
          %s215 = sadd.s32 %s214, %s25
          %s216 = smul.addr %s215, 128
          %s217 = scalar_lea.hbm %s1, %s216
          %s219 = sshll.u32 %s210, 4
          %s220 = int_to_ptr.vmem [resolvable:$true] %s219
          %222 = dma.hbm_to_vmem [thread:$0]  %s217, 128, %s220, %s207
        $region24: #{tpu_custom_call.1} parent=15 // pred_fallthru
          _
        // Predicated region
        $region25: #{tpu_custom_call.1} parent=15 // pred_check
          %p223 = pneg %p128
        $region26: #{tpu_custom_call.1} parent=15 // pred_check_branch
          %225 = sbr.rel (%p223) target = $region28
        $region27: #{tpu_custom_call.1} parent=15 // pred_region
          %s226 = sand.u32 %s18, 1
          %s227 = scalar_lea.sflag [#allocation9], %s226
          %s228 = sand.u32 %s118, 1
          %s229 = smul.addr %s228, 8
          %s230 = scalar_lea.vmem [#allocation10], %s229
          %s232 = ssub.s32 128, 128
          %233 = vsyncadd %s227, %s232
          %s234 = sadd.s32 %s26, %s28
          %s235 = sadd.s32 %s234, %s25
          %s236 = smul.addr %s235, 128
          %s237 = scalar_lea.hbm %s2, %s236
          %s239 = sshll.u32 %s230, 4
          %s240 = int_to_ptr.vmem [resolvable:$true] %s239
          %242 = dma.hbm_to_vmem [thread:$0]  %s237, 128, %s240, %s227
        $region28: #{tpu_custom_call.1} parent=15 // pred_fallthru
          _
      $region16: #{tpu_custom_call.1} parent=5 // pred_fallthru
        _
      %p243 = scmp.le.s32.totalorder 1, %s18
      %p244 = scmp.lt.s32.totalorder %s18, 3
      %p245 = pnand %p243, %p244
      %p246 = pneg %p245
      // Predicated region
      $region29: #{tpu_custom_call.1} parent=5 // pred_check
        _
      $region30: #{tpu_custom_call.1} parent=5 // pred_check_branch
        %248 = sbr.rel (%p245) target = $region32
      $region31: #{tpu_custom_call.1} parent=5 // pred_region
        %s249 = ssub.s32 %s18, 1
        %s250 = sand.u32 %s61, 1
        %s251 = scalar_lea.sflag [#allocation6], %s250
        %s252 = sand.u32 %s61, 1
        %s253 = smul.addr %s252, 8
        %s254 = scalar_lea.vmem [#allocation5], %s253
        // Predicated region
        $region33: #{tpu_custom_call.1} parent=31 // pred_check
          %p255 = pneg %p74
        $region34: #{tpu_custom_call.1} parent=31 // pred_check_branch
          %257 = sbr.rel (%p255) target = $region36
        $region35: #{tpu_custom_call.1} parent=31 // pred_region
          %258 = dma.done %s251, 128
        $region36: #{tpu_custom_call.1} parent=31 // pred_fallthru
          _
        %s259 = sand.u32 %s23, 1
        %s260 = scalar_lea.sflag [#allocation9], %s259
        %s261 = sand.u32 %s91, 1
        %s262 = smul.addr %s261, 8
        %s263 = scalar_lea.vmem [#allocation8], %s262
        // Predicated region
        $region37: #{tpu_custom_call.1} parent=31 // pred_check
          %p264 = pneg %p104
        $region38: #{tpu_custom_call.1} parent=31 // pred_check_branch
          %266 = sbr.rel (%p264) target = $region40
        $region39: #{tpu_custom_call.1} parent=31 // pred_region
          %267 = dma.done %s260, 128
        $region40: #{tpu_custom_call.1} parent=31 // pred_fallthru
          _
        %s268 = sand.u32 %s23, 1
        %s269 = scalar_lea.sflag [#allocation9], %s268
        %s270 = sand.u32 %s121, 1
        %s271 = smul.addr %s270, 8
        %s272 = scalar_lea.vmem [#allocation10], %s271
        // Predicated region
        $region41: #{tpu_custom_call.1} parent=31 // pred_check
          %p273 = pneg %p134
        $region42: #{tpu_custom_call.1} parent=31 // pred_check_branch
          %275 = sbr.rel (%p273) target = $region44
        $region43: #{tpu_custom_call.1} parent=31 // pred_region
          %276 = dma.done %s269, 128
        $region44: #{tpu_custom_call.1} parent=31 // pred_fallthru
          _
        %s277 = sand.u32 %s61, 1
        %s278 = scalar_lea.sflag [#allocation6], %s277
        %s279 = sand.u32 %s61, 1
        %s280 = smul.addr %s279, 8
        %s281 = scalar_lea.vmem [#allocation5], %s280
        %p282 = pneg %p74
        %p283 = pneg %p71
        %s284 = sand.u32 %s23, 1
        %s285 = scalar_lea.sflag [#allocation9], %s284
        %s286 = sand.u32 %s91, 1
        %s287 = smul.addr %s286, 8
        %s288 = scalar_lea.vmem [#allocation8], %s287
        %p289 = pneg %p104
        %p290 = pneg %p101
        %s291 = sand.u32 %s23, 1
        %s292 = scalar_lea.sflag [#allocation9], %s291
        %s293 = sand.u32 %s121, 1
        %s294 = smul.addr %s293, 8
        %s295 = scalar_lea.vmem [#allocation10], %s294
        %p296 = pneg %p134
        %p297 = pneg %p131
        %p298 = pneg %p164
        %p299 = pneg %p161
        %s300 = sand.u32 %s151, 1
        %s301 = scalar_lea.sflag [#allocation7], %s300
        %s302 = sand.u32 %s151, 1
        %s303 = smul.addr %s302, 8
        %s304 = scalar_lea.vmem [#allocation11], %s303
        %p305 = scmp.eq.s32.totalorder %s32, 0
        // Predicated region
        $region45: #{tpu_custom_call.1} parent=31 // pred_check
          %p306 = pneg %p305
        $region46: #{tpu_custom_call.1} parent=31 // pred_check_branch
          %308 = sbr.rel (%p306) target = $region48
        $region47: #{tpu_custom_call.1} parent=31 // pred_region
          %vm309 = vcmask 31744
          %310 = vst.msk [vmem:[#allocation2] sm:$0xff] %vm309, -inf
          %311 = vst.msk [vmem:[#allocation3] sm:$0xff] %vm309, 0.0
          %vm312 = vcmask 261120
          %313 = vst.msk [vmem:[#allocation4] sm:$0xff] %vm312, 0.0
        $region48: #{tpu_custom_call.1} parent=31 // pred_fallthru
          _
        %v314 = vld [vmem:[%s254] sm:$0xff]
        %v315 = vmul.f32 %v314, 0.35355338
        %v316 = vld [vmem:[%s263] sm:$0xff]
        %v317 = vld [vmem:[%s272] sm:$0xff]
        %vm318 = vcmask 64512
        %v320 = vsel %vm318, %v315, 0
        %v323 = vsel %vm318, %v316, 0
        %325 = vmatprep.subr.mxu0 0.0
        %326 = vmatpush1.xpose.msra.mxu0 %v323
        %327 = vmatprep.subr.mxu0 0.0
        %328 = vmatpush1.xpose.msra.mxu0 0.0
        %329 = vmatprep.subr.mxu0 0.0
        %330 = vmatpush1.xpose.msra.mxu0 0.0
        %331 = vmatprep.subr.mxu0 0.0
        %332 = vmatpush1.xpose.msra.mxu0 0.0
        %333 = vmatprep.subr.mxu0 0.0
        %334 = vmatpush1.xpose.msra.mxu0 0.0
        %335 = vmatprep.subr.mxu0 0.0
        %336 = vmatpush1.xpose.msra.mxu0 0.0
        %337 = vmatprep.subr.mxu0 0.0
        %338 = vmatpush1.xpose.msra.mxu0 0.0
        %339 = vmatprep.subr.mxu0 0.0
        %340 = vmatpush1.xpose.msra.mxu0 0.0
        %341 = vmatprep.subr.mxu0 0.0
        %342 = vmatpush1.xpose.msra.mxu0 0.0
        %343 = vmatprep.subr.mxu0 0.0
        %344 = vmatpush1.xpose.msra.mxu0 0.0
        %345 = vmatprep.subr.mxu0 0.0
        %346 = vmatpush1.xpose.msra.mxu0 0.0
        %347 = vmatprep.subr.mxu0 0.0
        %348 = vmatpush1.xpose.msra.mxu0 0.0
        %349 = vmatprep.subr.mxu0 0.0
        %350 = vmatpush1.xpose.msra.mxu0 0.0
        %351 = vmatprep.subr.mxu0 0.0
        %352 = vmatpush1.xpose.msra.mxu0 0.0
        %353 = vmatprep.subr.mxu0 0.0
        %354 = vmatpush1.xpose.msra.mxu0 0.0
        %355 = vmatprep.subr.mxu0 0.0
        %356 = vmatpush1.xpose.msra.mxu0 0.0
        %357 = vmatprep.subr.mxu0 0.0
        %358 = vmatpush1.xpose.msra.mxu0 0.0
        %359 = vmatprep.subr.mxu0 0.0
        %360 = vmatpush1.xpose.msra.mxu0 0.0
        %361 = vmatprep.subr.mxu0 0.0
        %362 = vmatpush1.xpose.msra.mxu0 0.0
        %363 = vmatprep.subr.mxu0 0.0
        %364 = vmatpush1.xpose.msra.mxu0 0.0
        %365 = vmatprep.subr.mxu0 0.0
        %366 = vmatpush1.xpose.msra.mxu0 0.0
        %367 = vmatprep.subr.mxu0 0.0
        %368 = vmatpush1.xpose.msra.mxu0 0.0
        %369 = vmatprep.subr.mxu0 0.0
        %370 = vmatpush1.xpose.msra.mxu0 0.0
        %371 = vmatprep.subr.mxu0 0.0
        %372 = vmatpush1.xpose.msra.mxu0 0.0
        %373 = vmatprep.subr.mxu0 0.0
        %374 = vmatpush1.xpose.msra.mxu0 0.0
        %375 = vmatprep.subr.mxu0 0.0
        %376 = vmatpush1.xpose.msra.mxu0 0.0
        %377 = vmatprep.subr.mxu0 0.0
        %378 = vmatpush1.xpose.msra.mxu0 0.0
        %379 = vmatprep.subr.mxu0 0.0
        %380 = vmatpush1.xpose.msra.mxu0 0.0
        %381 = vmatprep.subr.mxu0 0.0
        %382 = vmatpush1.xpose.msra.mxu0 0.0
        %383 = vmatprep.subr.mxu0 0.0
        %384 = vmatpush1.xpose.msra.mxu0 0.0
        %385 = vmatprep.subr.mxu0 0.0
        %386 = vmatpush1.xpose.msra.mxu0 0.0
        %387 = vmatprep.subr.mxu0 0.0
        %388 = vmatpush1.xpose.msra.mxu0 0.0
        %389 = vmatprep.mubr.f32.mxu0 0.0
        %390 = vmatmul.mubr.f32.gmra.mrb[0].mxu0 %v320
        %v391 = vpop.f32.mrb[0].mxu0
        %v392 = vadd.f32 0.0, %v391
        %v393 = vpop.f32.mrb[0].mxu0
        %394 = vdwg.mxu0
        %v395 = vld [vmem:[#allocation2] sm:$0xff]
        %v396 = vsel %vm318, %v392, -inf
        %397 = vmax.xlane.f32.xlu0 %v396
        %v398 = vpop.xlane.xlu0 %397
        %v399 = vmax.f32 %v395, %v398
        %v400 = vsub.f32 %v395, %v399
        %v401 = vmul.f32 %v400, 1.442695
        %v402 = vpow.pop %v401
        %404 = vset.pattern.permute.xlu0 0
        %405 = vperm.xlu0 %404, %v399
        %v406 = vpop.permute.xlu0 %405
        %v408 = vsub.f32 %v392, %v406
        %v409 = vmul.f32 %v408, 1.442695
        %v410 = vpow.pop %v409
        %v411 = vld [vmem:[#allocation3] sm:$0xff]
        %v412 = vmul.f32 %v402, %v411
        %v413 = vsel %vm318, %v410, 0.0
        %414 = vadd.xlane.f32.xlu0 %v413
        %v415 = vpop.xlane.xlu0 %414
        %v416 = vadd.f32 %v412, %v415
        %vm417 = vcmask 7168
        %418 = vst.msk [vmem:[#allocation3] sm:$0xff] %vm417, %v416
        %v420 = vsel %vm318, %v410, 0
        %422 = vmatprep.subr.mxu0 0.0
        %423 = vmatpush1.msra.mxu0 %v317
        %424 = vmatprep.subr.mxu0 0.0
        %425 = vmatpush1.msra.mxu0 0.0
        %426 = vmatprep.subr.mxu0 0.0
        %427 = vmatpush1.msra.mxu0 0.0
        %428 = vmatprep.subr.mxu0 0.0
        %429 = vmatpush1.msra.mxu0 0.0
        %430 = vmatprep.subr.mxu0 0.0
        %431 = vmatpush1.msra.mxu0 0.0
        %432 = vmatprep.subr.mxu0 0.0
        %433 = vmatpush1.msra.mxu0 0.0
        %434 = vmatprep.subr.mxu0 0.0
        %435 = vmatpush1.msra.mxu0 0.0
        %436 = vmatprep.subr.mxu0 0.0
        %437 = vmatpush1.msra.mxu0 0.0
        %438 = vmatprep.subr.mxu0 0.0
        %439 = vmatpush1.msra.mxu0 0.0
        %440 = vmatprep.subr.mxu0 0.0
        %441 = vmatpush1.msra.mxu0 0.0
        %442 = vmatprep.subr.mxu0 0.0
        %443 = vmatpush1.msra.mxu0 0.0
        %444 = vmatprep.subr.mxu0 0.0
        %445 = vmatpush1.msra.mxu0 0.0
        %446 = vmatprep.subr.mxu0 0.0
        %447 = vmatpush1.msra.mxu0 0.0
        %448 = vmatprep.subr.mxu0 0.0
        %449 = vmatpush1.msra.mxu0 0.0
        %450 = vmatprep.subr.mxu0 0.0
        %451 = vmatpush1.msra.mxu0 0.0
        %452 = vmatprep.subr.mxu0 0.0
        %453 = vmatpush1.msra.mxu0 0.0
        %454 = vmatprep.subr.mxu0 0.0
        %455 = vmatpush1.msra.mxu0 0.0
        %456 = vmatprep.subr.mxu0 0.0
        %457 = vmatpush1.msra.mxu0 0.0
        %458 = vmatprep.subr.mxu0 0.0
        %459 = vmatpush1.msra.mxu0 0.0
        %460 = vmatprep.subr.mxu0 0.0
        %461 = vmatpush1.msra.mxu0 0.0
        %462 = vmatprep.subr.mxu0 0.0
        %463 = vmatpush1.msra.mxu0 0.0
        %464 = vmatprep.subr.mxu0 0.0
        %465 = vmatpush1.msra.mxu0 0.0
        %466 = vmatprep.subr.mxu0 0.0
        %467 = vmatpush1.msra.mxu0 0.0
        %468 = vmatprep.subr.mxu0 0.0
        %469 = vmatpush1.msra.mxu0 0.0
        %470 = vmatprep.subr.mxu0 0.0
        %471 = vmatpush1.msra.mxu0 0.0
        %472 = vmatprep.subr.mxu0 0.0
        %473 = vmatpush1.msra.mxu0 0.0
        %474 = vmatprep.subr.mxu0 0.0
        %475 = vmatpush1.msra.mxu0 0.0
        %476 = vmatprep.subr.mxu0 0.0
        %477 = vmatpush1.msra.mxu0 0.0
        %478 = vmatprep.subr.mxu0 0.0
        %479 = vmatpush1.msra.mxu0 0.0
        %480 = vmatprep.subr.mxu0 0.0
        %481 = vmatpush1.msra.mxu0 0.0
        %482 = vmatprep.subr.mxu0 0.0
        %483 = vmatpush1.msra.mxu0 0.0
        %484 = vmatprep.subr.mxu0 0.0
        %485 = vmatpush1.msra.mxu0 0.0
        %486 = vmatprep.mubr.f32.mxu0 0.0
        %487 = vmatmul.mubr.f32.gmra.mrb[0].mxu0 %v420
        %v488 = vpop.f32.mrb[0].mxu0
        %v489 = vadd.f32 0.0, %v488
        %v490 = vpop.f32.mrb[0].mxu0
        %491 = vdwg.mxu0
        %v492 = vld [vmem:[#allocation4] sm:$0xff]
        %494 = vset.pattern.permute.xlu0 0
        %495 = vperm.xlu0 %494, %v402
        %v496 = vpop.permute.xlu0 %495
        %v498 = vmul.f32 %v496, %v492
        %v499 = vadd.f32 %v498, %v489
        %500 = vst.msk [vmem:[#allocation4] sm:$0xff] %vm318, %v499
        %501 = vst.msk [vmem:[#allocation2] sm:$0xff] %vm417, %v399
        %v502 = vld [vmem:[%s254] sm:$0xff]
        %v503 = vmul.f32 %v502, 0.35355338
        %v504 = vld [vmem:[%s263] sm:$0xff]
        %v505 = vld [vmem:[%s272] sm:$0xff]
        %507 = vrot.lane.b32.xlu0 %v503, 120
        %v508 = vpop.permute.xlu0 %507
        %510 = vrot.lane.b32.xlu0 %v504, 120
        %v511 = vpop.permute.xlu0 %510
        %v512 = vsel %vm318, %v508, 0
        %v514 = vsel %vm318, %v511, 0
        %516 = vmatprep.subr.mxu0 0.0
        %517 = vmatpush1.xpose.msra.mxu0 %v514
        %518 = vmatprep.subr.mxu0 0.0
        %519 = vmatpush1.xpose.msra.mxu0 0.0
        %520 = vmatprep.subr.mxu0 0.0
        %521 = vmatpush1.xpose.msra.mxu0 0.0
        %522 = vmatprep.subr.mxu0 0.0
        %523 = vmatpush1.xpose.msra.mxu0 0.0
        %524 = vmatprep.subr.mxu0 0.0
        %525 = vmatpush1.xpose.msra.mxu0 0.0
        %526 = vmatprep.subr.mxu0 0.0
        %527 = vmatpush1.xpose.msra.mxu0 0.0
        %528 = vmatprep.subr.mxu0 0.0
        %529 = vmatpush1.xpose.msra.mxu0 0.0
        %530 = vmatprep.subr.mxu0 0.0
        %531 = vmatpush1.xpose.msra.mxu0 0.0
        %532 = vmatprep.subr.mxu0 0.0
        %533 = vmatpush1.xpose.msra.mxu0 0.0
        %534 = vmatprep.subr.mxu0 0.0
        %535 = vmatpush1.xpose.msra.mxu0 0.0
        %536 = vmatprep.subr.mxu0 0.0
        %537 = vmatpush1.xpose.msra.mxu0 0.0
        %538 = vmatprep.subr.mxu0 0.0
        %539 = vmatpush1.xpose.msra.mxu0 0.0
        %540 = vmatprep.subr.mxu0 0.0
        %541 = vmatpush1.xpose.msra.mxu0 0.0
        %542 = vmatprep.subr.mxu0 0.0
        %543 = vmatpush1.xpose.msra.mxu0 0.0
        %544 = vmatprep.subr.mxu0 0.0
        %545 = vmatpush1.xpose.msra.mxu0 0.0
        %546 = vmatprep.subr.mxu0 0.0
        %547 = vmatpush1.xpose.msra.mxu0 0.0
        %548 = vmatprep.subr.mxu0 0.0
        %549 = vmatpush1.xpose.msra.mxu0 0.0
        %550 = vmatprep.subr.mxu0 0.0
        %551 = vmatpush1.xpose.msra.mxu0 0.0
        %552 = vmatprep.subr.mxu0 0.0
        %553 = vmatpush1.xpose.msra.mxu0 0.0
        %554 = vmatprep.subr.mxu0 0.0
        %555 = vmatpush1.xpose.msra.mxu0 0.0
        %556 = vmatprep.subr.mxu0 0.0
        %557 = vmatpush1.xpose.msra.mxu0 0.0
        %558 = vmatprep.subr.mxu0 0.0
        %559 = vmatpush1.xpose.msra.mxu0 0.0
        %560 = vmatprep.subr.mxu0 0.0
        %561 = vmatpush1.xpose.msra.mxu0 0.0
        %562 = vmatprep.subr.mxu0 0.0
        %563 = vmatpush1.xpose.msra.mxu0 0.0
        %564 = vmatprep.subr.mxu0 0.0
        %565 = vmatpush1.xpose.msra.mxu0 0.0
        %566 = vmatprep.subr.mxu0 0.0
        %567 = vmatpush1.xpose.msra.mxu0 0.0
        %568 = vmatprep.subr.mxu0 0.0
        %569 = vmatpush1.xpose.msra.mxu0 0.0
        %570 = vmatprep.subr.mxu0 0.0
        %571 = vmatpush1.xpose.msra.mxu0 0.0
        %572 = vmatprep.subr.mxu0 0.0
        %573 = vmatpush1.xpose.msra.mxu0 0.0
        %574 = vmatprep.subr.mxu0 0.0
        %575 = vmatpush1.xpose.msra.mxu0 0.0
        %576 = vmatprep.subr.mxu0 0.0
        %577 = vmatpush1.xpose.msra.mxu0 0.0
        %578 = vmatprep.subr.mxu0 0.0
        %579 = vmatpush1.xpose.msra.mxu0 0.0
        %580 = vmatprep.mubr.f32.mxu0 0.0
        %581 = vmatmul.mubr.f32.gmra.mrb[0].mxu0 %v512
        %v582 = vpop.f32.mrb[0].mxu0
        %v583 = vadd.f32 0.0, %v582
        %v584 = vpop.f32.mrb[0].mxu0
        %585 = vdwg.mxu0
        %v586 = vld [vmem:[#allocation2] sm:$0xff]
        %v587 = vsel %vm318, %v583, -inf
        %588 = vmax.xlane.f32.xlu0 %v587
        %v589 = vpop.xlane.xlu0 %588
        %v590 = vmax.f32 %v586, %v589
        %v591 = vsub.f32 %v586, %v590
        %v592 = vmul.f32 %v591, 1.442695
        %v593 = vpow.pop %v592
        %595 = vset.pattern.permute.xlu0 1
        %596 = vperm.xlu0 %595, %v590
        %v597 = vpop.permute.xlu0 %596
        %v599 = vsub.f32 %v583, %v597
        %v600 = vmul.f32 %v599, 1.442695
        %v601 = vpow.pop %v600
        %v602 = vld [vmem:[#allocation3] sm:$0xff]
        %v603 = vmul.f32 %v593, %v602
        %v604 = vsel %vm318, %v601, 0.0
        %605 = vadd.xlane.f32.xlu0 %v604
        %v606 = vpop.xlane.xlu0 %605
        %v607 = vadd.f32 %v603, %v606
        %vm608 = vcmask 15368
        %609 = vst.msk [vmem:[#allocation3] sm:$0xff] %vm608, %v607
        %611 = vrot.lane.b32.xlu0 %v505, 120
        %v612 = vpop.permute.xlu0 %611
        %v615 = vsel %vm318, %v601, 0
        %617 = vmatprep.subr.mxu0 0.0
        %618 = vmatpush1.msra.mxu0 %v612
        %619 = vmatprep.subr.mxu0 0.0
        %620 = vmatpush1.msra.mxu0 0.0
        %621 = vmatprep.subr.mxu0 0.0
        %622 = vmatpush1.msra.mxu0 0.0
        %623 = vmatprep.subr.mxu0 0.0
        %624 = vmatpush1.msra.mxu0 0.0
        %625 = vmatprep.subr.mxu0 0.0
        %626 = vmatpush1.msra.mxu0 0.0
        %627 = vmatprep.subr.mxu0 0.0
        %628 = vmatpush1.msra.mxu0 0.0
        %629 = vmatprep.subr.mxu0 0.0
        %630 = vmatpush1.msra.mxu0 0.0
        %631 = vmatprep.subr.mxu0 0.0
        %632 = vmatpush1.msra.mxu0 0.0
        %633 = vmatprep.subr.mxu0 0.0
        %634 = vmatpush1.msra.mxu0 0.0
        %635 = vmatprep.subr.mxu0 0.0
        %636 = vmatpush1.msra.mxu0 0.0
        %637 = vmatprep.subr.mxu0 0.0
        %638 = vmatpush1.msra.mxu0 0.0
        %639 = vmatprep.subr.mxu0 0.0
        %640 = vmatpush1.msra.mxu0 0.0
        %641 = vmatprep.subr.mxu0 0.0
        %642 = vmatpush1.msra.mxu0 0.0
        %643 = vmatprep.subr.mxu0 0.0
        %644 = vmatpush1.msra.mxu0 0.0
        %645 = vmatprep.subr.mxu0 0.0
        %646 = vmatpush1.msra.mxu0 0.0
        %647 = vmatprep.subr.mxu0 0.0
        %648 = vmatpush1.msra.mxu0 0.0
        %649 = vmatprep.subr.mxu0 0.0
        %650 = vmatpush1.msra.mxu0 0.0
        %651 = vmatprep.subr.mxu0 0.0
        %652 = vmatpush1.msra.mxu0 0.0
        %653 = vmatprep.subr.mxu0 0.0
        %654 = vmatpush1.msra.mxu0 0.0
        %655 = vmatprep.subr.mxu0 0.0
        %656 = vmatpush1.msra.mxu0 0.0
        %657 = vmatprep.subr.mxu0 0.0
        %658 = vmatpush1.msra.mxu0 0.0
        %659 = vmatprep.subr.mxu0 0.0
        %660 = vmatpush1.msra.mxu0 0.0
        %661 = vmatprep.subr.mxu0 0.0
        %662 = vmatpush1.msra.mxu0 0.0
        %663 = vmatprep.subr.mxu0 0.0
        %664 = vmatpush1.msra.mxu0 0.0
        %665 = vmatprep.subr.mxu0 0.0
        %666 = vmatpush1.msra.mxu0 0.0
        %667 = vmatprep.subr.mxu0 0.0
        %668 = vmatpush1.msra.mxu0 0.0
        %669 = vmatprep.subr.mxu0 0.0
        %670 = vmatpush1.msra.mxu0 0.0
        %671 = vmatprep.subr.mxu0 0.0
        %672 = vmatpush1.msra.mxu0 0.0
        %673 = vmatprep.subr.mxu0 0.0
        %674 = vmatpush1.msra.mxu0 0.0
        %675 = vmatprep.subr.mxu0 0.0
        %676 = vmatpush1.msra.mxu0 0.0
        %677 = vmatprep.subr.mxu0 0.0
        %678 = vmatpush1.msra.mxu0 0.0
        %679 = vmatprep.subr.mxu0 0.0
        %680 = vmatpush1.msra.mxu0 0.0
        %681 = vmatprep.mubr.f32.mxu0 0.0
        %682 = vmatmul.mubr.f32.gmra.mrb[0].mxu0 %v615
        %v683 = vpop.f32.mrb[0].mxu0
        %v684 = vadd.f32 0.0, %v683
        %v685 = vpop.f32.mrb[0].mxu0
        %686 = vdwg.mxu0
        %v687 = vld [vmem:[#allocation4] sm:$0xff]
        %689 = vset.pattern.permute.xlu0 1
        %690 = vperm.xlu0 %689, %v593
        %v691 = vpop.permute.xlu0 %690
        %v693 = vmul.f32 %v691, %v687
        %695 = vrot.lane.b32.xlu0 %v684, 8
        %v696 = vpop.permute.xlu0 %695
        %v698 = vadd.f32 %v693, %v696
        %vm699 = vcmask 130112
        %700 = vst.msk [vmem:[#allocation4] sm:$0xff] %vm699, %v698
        %701 = vst.msk [vmem:[#allocation2] sm:$0xff] %vm608, %v590
        %v702 = vld [vmem:[%s254] sm:$0xff]
        %v703 = vmul.f32 %v702, 0.35355338
        %v704 = vld [vmem:[%s263] sm:$0xff]
        %v705 = vld [vmem:[%s272] sm:$0xff]
        %707 = vrot.lane.b32.xlu0 %v703, 112
        %v708 = vpop.permute.xlu0 %707
        %710 = vrot.lane.b32.xlu0 %v704, 112
        %v711 = vpop.permute.xlu0 %710
        %v712 = vsel %vm318, %v708, 0
        %v714 = vsel %vm318, %v711, 0
        %716 = vmatprep.subr.mxu0 0.0
        %717 = vmatpush1.xpose.msra.mxu0 %v714
        %718 = vmatprep.subr.mxu0 0.0
        %719 = vmatpush1.xpose.msra.mxu0 0.0
        %720 = vmatprep.subr.mxu0 0.0
        %721 = vmatpush1.xpose.msra.mxu0 0.0
        %722 = vmatprep.subr.mxu0 0.0
        %723 = vmatpush1.xpose.msra.mxu0 0.0
        %724 = vmatprep.subr.mxu0 0.0
        %725 = vmatpush1.xpose.msra.mxu0 0.0
        %726 = vmatprep.subr.mxu0 0.0
        %727 = vmatpush1.xpose.msra.mxu0 0.0
        %728 = vmatprep.subr.mxu0 0.0
        %729 = vmatpush1.xpose.msra.mxu0 0.0
        %730 = vmatprep.subr.mxu0 0.0
        %731 = vmatpush1.xpose.msra.mxu0 0.0
        %732 = vmatprep.subr.mxu0 0.0
        %733 = vmatpush1.xpose.msra.mxu0 0.0
        %734 = vmatprep.subr.mxu0 0.0
        %735 = vmatpush1.xpose.msra.mxu0 0.0
        %736 = vmatprep.subr.mxu0 0.0
        %737 = vmatpush1.xpose.msra.mxu0 0.0
        %738 = vmatprep.subr.mxu0 0.0
        %739 = vmatpush1.xpose.msra.mxu0 0.0
        %740 = vmatprep.subr.mxu0 0.0
        %741 = vmatpush1.xpose.msra.mxu0 0.0
        %742 = vmatprep.subr.mxu0 0.0
        %743 = vmatpush1.xpose.msra.mxu0 0.0
        %744 = vmatprep.subr.mxu0 0.0
        %745 = vmatpush1.xpose.msra.mxu0 0.0
        %746 = vmatprep.subr.mxu0 0.0
        %747 = vmatpush1.xpose.msra.mxu0 0.0
        %748 = vmatprep.subr.mxu0 0.0
        %749 = vmatpush1.xpose.msra.mxu0 0.0
        %750 = vmatprep.subr.mxu0 0.0
        %751 = vmatpush1.xpose.msra.mxu0 0.0
        %752 = vmatprep.subr.mxu0 0.0
        %753 = vmatpush1.xpose.msra.mxu0 0.0
        %754 = vmatprep.subr.mxu0 0.0
        %755 = vmatpush1.xpose.msra.mxu0 0.0
        %756 = vmatprep.subr.mxu0 0.0
        %757 = vmatpush1.xpose.msra.mxu0 0.0
        %758 = vmatprep.subr.mxu0 0.0
        %759 = vmatpush1.xpose.msra.mxu0 0.0
        %760 = vmatprep.subr.mxu0 0.0
        %761 = vmatpush1.xpose.msra.mxu0 0.0
        %762 = vmatprep.subr.mxu0 0.0
        %763 = vmatpush1.xpose.msra.mxu0 0.0
        %764 = vmatprep.subr.mxu0 0.0
        %765 = vmatpush1.xpose.msra.mxu0 0.0
        %766 = vmatprep.subr.mxu0 0.0
        %767 = vmatpush1.xpose.msra.mxu0 0.0
        %768 = vmatprep.subr.mxu0 0.0
        %769 = vmatpush1.xpose.msra.mxu0 0.0
        %770 = vmatprep.subr.mxu0 0.0
        %771 = vmatpush1.xpose.msra.mxu0 0.0
        %772 = vmatprep.subr.mxu0 0.0
        %773 = vmatpush1.xpose.msra.mxu0 0.0
        %774 = vmatprep.subr.mxu0 0.0
        %775 = vmatpush1.xpose.msra.mxu0 0.0
        %776 = vmatprep.subr.mxu0 0.0
        %777 = vmatpush1.xpose.msra.mxu0 0.0
        %778 = vmatprep.subr.mxu0 0.0
        %779 = vmatpush1.xpose.msra.mxu0 0.0
        %780 = vmatprep.mubr.f32.mxu0 0.0
        %781 = vmatmul.mubr.f32.gmra.mrb[0].mxu0 %v712
        %v782 = vpop.f32.mrb[0].mxu0
        %v783 = vadd.f32 0.0, %v782
        %v784 = vpop.f32.mrb[0].mxu0
        %785 = vdwg.mxu0
        %v786 = vld [vmem:[#allocation2] sm:$0xff]
        %v787 = vsel %vm318, %v783, -inf
        %788 = vmax.xlane.f32.xlu0 %v787
        %v789 = vpop.xlane.xlu0 %788
        %v790 = vmax.f32 %v786, %v789
        %v791 = vsub.f32 %v786, %v790
        %v792 = vmul.f32 %v791, 1.442695
        %v793 = vpow.pop %v792
        %795 = vset.pattern.permute.xlu0 2
        %796 = vperm.xlu0 %795, %v790
        %v797 = vpop.permute.xlu0 %796
        %v799 = vsub.f32 %v783, %v797
        %v800 = vmul.f32 %v799, 1.442695
        %v801 = vpow.pop %v800
        %v802 = vld [vmem:[#allocation3] sm:$0xff]
        %v803 = vmul.f32 %v793, %v802
        %v804 = vsel %vm318, %v801, 0.0
        %805 = vadd.xlane.f32.xlu0 %v804
        %v806 = vpop.xlane.xlu0 %805
        %v807 = vadd.f32 %v803, %v806
        %vm808 = vcmask 23568
        %809 = vst.msk [vmem:[#allocation3] sm:$0xff] %vm808, %v807
        %811 = vrot.lane.b32.xlu0 %v705, 112
        %v812 = vpop.permute.xlu0 %811
        %v815 = vsel %vm318, %v801, 0
        %817 = vmatprep.subr.mxu0 0.0
        %818 = vmatpush1.msra.mxu0 %v812
        %819 = vmatprep.subr.mxu0 0.0
        %820 = vmatpush1.msra.mxu0 0.0
        %821 = vmatprep.subr.mxu0 0.0
        %822 = vmatpush1.msra.mxu0 0.0
        %823 = vmatprep.subr.mxu0 0.0
        %824 = vmatpush1.msra.mxu0 0.0
        %825 = vmatprep.subr.mxu0 0.0
        %826 = vmatpush1.msra.mxu0 0.0
        %827 = vmatprep.subr.mxu0 0.0
        %828 = vmatpush1.msra.mxu0 0.0
        %829 = vmatprep.subr.mxu0 0.0
        %830 = vmatpush1.msra.mxu0 0.0
        %831 = vmatprep.subr.mxu0 0.0
        %832 = vmatpush1.msra.mxu0 0.0
        %833 = vmatprep.subr.mxu0 0.0
        %834 = vmatpush1.msra.mxu0 0.0
        %835 = vmatprep.subr.mxu0 0.0
        %836 = vmatpush1.msra.mxu0 0.0
        %837 = vmatprep.subr.mxu0 0.0
        %838 = vmatpush1.msra.mxu0 0.0
        %839 = vmatprep.subr.mxu0 0.0
        %840 = vmatpush1.msra.mxu0 0.0
        %841 = vmatprep.subr.mxu0 0.0
        %842 = vmatpush1.msra.mxu0 0.0
        %843 = vmatprep.subr.mxu0 0.0
        %844 = vmatpush1.msra.mxu0 0.0
        %845 = vmatprep.subr.mxu0 0.0
        %846 = vmatpush1.msra.mxu0 0.0
        %847 = vmatprep.subr.mxu0 0.0
        %848 = vmatpush1.msra.mxu0 0.0
        %849 = vmatprep.subr.mxu0 0.0
        %850 = vmatpush1.msra.mxu0 0.0
        %851 = vmatprep.subr.mxu0 0.0
        %852 = vmatpush1.msra.mxu0 0.0
        %853 = vmatprep.subr.mxu0 0.0
        %854 = vmatpush1.msra.mxu0 0.0
        %855 = vmatprep.subr.mxu0 0.0
        %856 = vmatpush1.msra.mxu0 0.0
        %857 = vmatprep.subr.mxu0 0.0
        %858 = vmatpush1.msra.mxu0 0.0
        %859 = vmatprep.subr.mxu0 0.0
        %860 = vmatpush1.msra.mxu0 0.0
        %861 = vmatprep.subr.mxu0 0.0
        %862 = vmatpush1.msra.mxu0 0.0
        %863 = vmatprep.subr.mxu0 0.0
        %864 = vmatpush1.msra.mxu0 0.0
        %865 = vmatprep.subr.mxu0 0.0
        %866 = vmatpush1.msra.mxu0 0.0
        %867 = vmatprep.subr.mxu0 0.0
        %868 = vmatpush1.msra.mxu0 0.0
        %869 = vmatprep.subr.mxu0 0.0
        %870 = vmatpush1.msra.mxu0 0.0
        %871 = vmatprep.subr.mxu0 0.0
        %872 = vmatpush1.msra.mxu0 0.0
        %873 = vmatprep.subr.mxu0 0.0
        %874 = vmatpush1.msra.mxu0 0.0
        %875 = vmatprep.subr.mxu0 0.0
        %876 = vmatpush1.msra.mxu0 0.0
        %877 = vmatprep.subr.mxu0 0.0
        %878 = vmatpush1.msra.mxu0 0.0
        %879 = vmatprep.subr.mxu0 0.0
        %880 = vmatpush1.msra.mxu0 0.0
        %881 = vmatprep.mubr.f32.mxu0 0.0
        %882 = vmatmul.mubr.f32.gmra.mrb[0].mxu0 %v815
        %v883 = vpop.f32.mrb[0].mxu0
        %v884 = vadd.f32 0.0, %v883
        %v885 = vpop.f32.mrb[0].mxu0
        %886 = vdwg.mxu0
        %v887 = vld [vmem:[#allocation4] sm:$0xff]
        %889 = vset.pattern.permute.xlu0 2
        %890 = vperm.xlu0 %889, %v793
        %v891 = vpop.permute.xlu0 %890
        %v893 = vmul.f32 %v891, %v887
        %895 = vrot.lane.b32.xlu0 %v884, 16
        %v896 = vpop.permute.xlu0 %895
        %v898 = vadd.f32 %v893, %v896
        %vm899 = vcmask 195712
        %900 = vst.msk [vmem:[#allocation4] sm:$0xff] %vm899, %v898
        %901 = vst.msk [vmem:[#allocation2] sm:$0xff] %vm808, %v790
        %v902 = vld [vmem:[%s254] sm:$0xff]
        %v903 = vmul.f32 %v902, 0.35355338
        %v904 = vld [vmem:[%s263] sm:$0xff]
        %v905 = vld [vmem:[%s272] sm:$0xff]
        %907 = vrot.lane.b32.xlu0 %v903, 104
        %v908 = vpop.permute.xlu0 %907
        %910 = vrot.lane.b32.xlu0 %v904, 104
        %v911 = vpop.permute.xlu0 %910
        %v912 = vsel %vm318, %v908, 0
        %v914 = vsel %vm318, %v911, 0
        %916 = vmatprep.subr.mxu0 0.0
        %917 = vmatpush1.xpose.msra.mxu0 %v914
        %918 = vmatprep.subr.mxu0 0.0
        %919 = vmatpush1.xpose.msra.mxu0 0.0
        %920 = vmatprep.subr.mxu0 0.0
        %921 = vmatpush1.xpose.msra.mxu0 0.0
        %922 = vmatprep.subr.mxu0 0.0
        %923 = vmatpush1.xpose.msra.mxu0 0.0
        %924 = vmatprep.subr.mxu0 0.0
        %925 = vmatpush1.xpose.msra.mxu0 0.0
        %926 = vmatprep.subr.mxu0 0.0
        %927 = vmatpush1.xpose.msra.mxu0 0.0
        %928 = vmatprep.subr.mxu0 0.0
        %929 = vmatpush1.xpose.msra.mxu0 0.0
        %930 = vmatprep.subr.mxu0 0.0
        %931 = vmatpush1.xpose.msra.mxu0 0.0
        %932 = vmatprep.subr.mxu0 0.0
        %933 = vmatpush1.xpose.msra.mxu0 0.0
        %934 = vmatprep.subr.mxu0 0.0
        %935 = vmatpush1.xpose.msra.mxu0 0.0
        %936 = vmatprep.subr.mxu0 0.0
        %937 = vmatpush1.xpose.msra.mxu0 0.0
        %938 = vmatprep.subr.mxu0 0.0
        %939 = vmatpush1.xpose.msra.mxu0 0.0
        %940 = vmatprep.subr.mxu0 0.0
        %941 = vmatpush1.xpose.msra.mxu0 0.0
        %942 = vmatprep.subr.mxu0 0.0
        %943 = vmatpush1.xpose.msra.mxu0 0.0
        %944 = vmatprep.subr.mxu0 0.0
        %945 = vmatpush1.xpose.msra.mxu0 0.0
        %946 = vmatprep.subr.mxu0 0.0
        %947 = vmatpush1.xpose.msra.mxu0 0.0
        %948 = vmatprep.subr.mxu0 0.0
        %949 = vmatpush1.xpose.msra.mxu0 0.0
        %950 = vmatprep.subr.mxu0 0.0
        %951 = vmatpush1.xpose.msra.mxu0 0.0
        %952 = vmatprep.subr.mxu0 0.0
        %953 = vmatpush1.xpose.msra.mxu0 0.0
        %954 = vmatprep.subr.mxu0 0.0
        %955 = vmatpush1.xpose.msra.mxu0 0.0
        %956 = vmatprep.subr.mxu0 0.0
        %957 = vmatpush1.xpose.msra.mxu0 0.0
        %958 = vmatprep.subr.mxu0 0.0
        %959 = vmatpush1.xpose.msra.mxu0 0.0
        %960 = vmatprep.subr.mxu0 0.0
        %961 = vmatpush1.xpose.msra.mxu0 0.0
        %962 = vmatprep.subr.mxu0 0.0
        %963 = vmatpush1.xpose.msra.mxu0 0.0
        %964 = vmatprep.subr.mxu0 0.0
        %965 = vmatpush1.xpose.msra.mxu0 0.0
        %966 = vmatprep.subr.mxu0 0.0
        %967 = vmatpush1.xpose.msra.mxu0 0.0
        %968 = vmatprep.subr.mxu0 0.0
        %969 = vmatpush1.xpose.msra.mxu0 0.0
        %970 = vmatprep.subr.mxu0 0.0
        %971 = vmatpush1.xpose.msra.mxu0 0.0
        %972 = vmatprep.subr.mxu0 0.0
        %973 = vmatpush1.xpose.msra.mxu0 0.0
        %974 = vmatprep.subr.mxu0 0.0
        %975 = vmatpush1.xpose.msra.mxu0 0.0
        %976 = vmatprep.subr.mxu0 0.0
        %977 = vmatpush1.xpose.msra.mxu0 0.0
        %978 = vmatprep.subr.mxu0 0.0
        %979 = vmatpush1.xpose.msra.mxu0 0.0
        %980 = vmatprep.mubr.f32.mxu0 0.0
        %981 = vmatmul.mubr.f32.gmra.mrb[0].mxu0 %v912
        %v982 = vpop.f32.mrb[0].mxu0
        %v983 = vadd.f32 0.0, %v982
        %v984 = vpop.f32.mrb[0].mxu0
        %985 = vdwg.mxu0
        %v986 = vld [vmem:[#allocation2] sm:$0xff]
        %v987 = vsel %vm318, %v983, -inf
        %988 = vmax.xlane.f32.xlu0 %v987
        %v989 = vpop.xlane.xlu0 %988
        %v990 = vmax.f32 %v986, %v989
        %v991 = vsub.f32 %v986, %v990
        %v992 = vmul.f32 %v991, 1.442695
        %v993 = vpow.pop %v992
        %995 = vset.pattern.permute.xlu0 3
        %996 = vperm.xlu0 %995, %v990
        %v997 = vpop.permute.xlu0 %996
        %v999 = vsub.f32 %v983, %v997
        %v1000 = vmul.f32 %v999, 1.442695
        %v1001 = vpow.pop %v1000
        %v1002 = vld [vmem:[#allocation3] sm:$0xff]
        %v1003 = vmul.f32 %v993, %v1002
        %v1004 = vsel %vm318, %v1001, 0.0
        %1005 = vadd.xlane.f32.xlu0 %v1004
        %v1006 = vpop.xlane.xlu0 %1005
        %v1007 = vadd.f32 %v1003, %v1006
        %vm1008 = vcmask 31768
        %1009 = vst.msk [vmem:[#allocation3] sm:$0xff] %vm1008, %v1007
        %1011 = vrot.lane.b32.xlu0 %v905, 104
        %v1012 = vpop.permute.xlu0 %1011
        %v1015 = vsel %vm318, %v1001, 0
        %1017 = vmatprep.subr.mxu0 0.0
        %1018 = vmatpush1.msra.mxu0 %v1012
        %1019 = vmatprep.subr.mxu0 0.0
        %1020 = vmatpush1.msra.mxu0 0.0
        %1021 = vmatprep.subr.mxu0 0.0
        %1022 = vmatpush1.msra.mxu0 0.0
        %1023 = vmatprep.subr.mxu0 0.0
        %1024 = vmatpush1.msra.mxu0 0.0
        %1025 = vmatprep.subr.mxu0 0.0
        %1026 = vmatpush1.msra.mxu0 0.0
        %1027 = vmatprep.subr.mxu0 0.0
        %1028 = vmatpush1.msra.mxu0 0.0
        %1029 = vmatprep.subr.mxu0 0.0
        %1030 = vmatpush1.msra.mxu0 0.0
        %1031 = vmatprep.subr.mxu0 0.0
        %1032 = vmatpush1.msra.mxu0 0.0
        %1033 = vmatprep.subr.mxu0 0.0
        %1034 = vmatpush1.msra.mxu0 0.0
        %1035 = vmatprep.subr.mxu0 0.0
        %1036 = vmatpush1.msra.mxu0 0.0
        %1037 = vmatprep.subr.mxu0 0.0
        %1038 = vmatpush1.msra.mxu0 0.0
        %1039 = vmatprep.subr.mxu0 0.0
        %1040 = vmatpush1.msra.mxu0 0.0
        %1041 = vmatprep.subr.mxu0 0.0
        %1042 = vmatpush1.msra.mxu0 0.0
        %1043 = vmatprep.subr.mxu0 0.0
        %1044 = vmatpush1.msra.mxu0 0.0
        %1045 = vmatprep.subr.mxu0 0.0
        %1046 = vmatpush1.msra.mxu0 0.0
        %1047 = vmatprep.subr.mxu0 0.0
        %1048 = vmatpush1.msra.mxu0 0.0
        %1049 = vmatprep.subr.mxu0 0.0
        %1050 = vmatpush1.msra.mxu0 0.0
        %1051 = vmatprep.subr.mxu0 0.0
        %1052 = vmatpush1.msra.mxu0 0.0
        %1053 = vmatprep.subr.mxu0 0.0
        %1054 = vmatpush1.msra.mxu0 0.0
        %1055 = vmatprep.subr.mxu0 0.0
        %1056 = vmatpush1.msra.mxu0 0.0
        %1057 = vmatprep.subr.mxu0 0.0
        %1058 = vmatpush1.msra.mxu0 0.0
        %1059 = vmatprep.subr.mxu0 0.0
        %1060 = vmatpush1.msra.mxu0 0.0
        %1061 = vmatprep.subr.mxu0 0.0
        %1062 = vmatpush1.msra.mxu0 0.0
        %1063 = vmatprep.subr.mxu0 0.0
        %1064 = vmatpush1.msra.mxu0 0.0
        %1065 = vmatprep.subr.mxu0 0.0
        %1066 = vmatpush1.msra.mxu0 0.0
        %1067 = vmatprep.subr.mxu0 0.0
        %1068 = vmatpush1.msra.mxu0 0.0
        %1069 = vmatprep.subr.mxu0 0.0
        %1070 = vmatpush1.msra.mxu0 0.0
        %1071 = vmatprep.subr.mxu0 0.0
        %1072 = vmatpush1.msra.mxu0 0.0
        %1073 = vmatprep.subr.mxu0 0.0
        %1074 = vmatpush1.msra.mxu0 0.0
        %1075 = vmatprep.subr.mxu0 0.0
        %1076 = vmatpush1.msra.mxu0 0.0
        %1077 = vmatprep.subr.mxu0 0.0
        %1078 = vmatpush1.msra.mxu0 0.0
        %1079 = vmatprep.subr.mxu0 0.0
        %1080 = vmatpush1.msra.mxu0 0.0
        %1081 = vmatprep.mubr.f32.mxu0 0.0
        %1082 = vmatmul.mubr.f32.gmra.mrb[0].mxu0 %v1015
        %v1083 = vpop.f32.mrb[0].mxu0
        %v1084 = vadd.f32 0.0, %v1083
        %v1085 = vpop.f32.mrb[0].mxu0
        %1086 = vdwg.mxu0
        %v1087 = vld [vmem:[#allocation4] sm:$0xff]
        %1089 = vset.pattern.permute.xlu0 3
        %1090 = vperm.xlu0 %1089, %v993
        %v1091 = vpop.permute.xlu0 %1090
        %v1093 = vmul.f32 %v1091, %v1087
        %1095 = vrot.lane.b32.xlu0 %v1084, 24
        %v1096 = vpop.permute.xlu0 %1095
        %v1098 = vadd.f32 %v1093, %v1096
        %vm1099 = vcmask 261312
        %1100 = vst.msk [vmem:[#allocation4] sm:$0xff] %vm1099, %v1098
        %1101 = vst.msk [vmem:[#allocation2] sm:$0xff] %vm1008, %v990
        // Predicated region
        $region49: #{tpu_custom_call.1} parent=31 // pred_check
          %p1102 = pneg %p305
        $region50: #{tpu_custom_call.1} parent=31 // pred_check_branch
          %1104 = sbr.rel (%p1102) target = $region52
        $region51: #{tpu_custom_call.1} parent=31 // pred_region
          %v1105 = vld [vmem:[#allocation3] sm:$0xff]
          %v1106 = vrcp.pop %v1105
          %v1107 = vld [vmem:[#allocation4] sm:$0xff]
          %1109 = vset.pattern.permute.xlu0 0
          %1110 = vperm.xlu0 %1109, %v1106
          %v1111 = vpop.permute.xlu0 %1110
          %v1113 = vmul.f32 %v1107, %v1111
          %1114 = vst.msk [vmem:[#allocation4] sm:$0xff] %vm318, %v1113
          %v1115 = vld [vmem:[#allocation4] sm:$0xff]
          %1116 = vset.pattern.permute.xlu0 1
          %1117 = vperm.xlu0 %1116, %v1106
          %v1118 = vpop.permute.xlu0 %1117
          %v1120 = vmul.f32 %v1115, %v1118
          %1121 = vst.msk [vmem:[#allocation4] sm:$0xff] %vm699, %v1120
          %v1122 = vld [vmem:[#allocation4] sm:$0xff]
          %1123 = vset.pattern.permute.xlu0 2
          %1124 = vperm.xlu0 %1123, %v1106
          %v1125 = vpop.permute.xlu0 %1124
          %v1127 = vmul.f32 %v1122, %v1125
          %1128 = vst.msk [vmem:[#allocation4] sm:$0xff] %vm899, %v1127
          %v1129 = vld [vmem:[#allocation4] sm:$0xff]
          %1130 = vset.pattern.permute.xlu0 3
          %1131 = vperm.xlu0 %1130, %v1106
          %v1132 = vpop.permute.xlu0 %1131
          %v1134 = vmul.f32 %v1129, %v1132
          %1135 = vst.msk [vmem:[#allocation4] sm:$0xff] %vm1099, %v1134
          %v1136 = vld [vmem:[#allocation4] sm:$0xff]
          %vm1137 = vcmask 261120
          %1138 = vst.msk [vmem:[%s304] sm:$0xff] %vm1137, %v1136
        $region52: #{tpu_custom_call.1} parent=31 // pred_fallthru
          _
        %s1139 = sand.u32 %s151, 1
        %s1140 = scalar_lea.sflag [#allocation7], %s1139
        %s1141 = sand.u32 %s151, 1
        %s1142 = smul.addr %s1141, 8
        %s1143 = scalar_lea.vmem [#allocation11], %s1142
        // Predicated region
        $region53: #{tpu_custom_call.1} parent=31 // pred_check
          %p1144 = pneg %p161
        $region54: #{tpu_custom_call.1} parent=31 // pred_check_branch
          %1146 = sbr.rel (%p1144) target = $region56
        $region55: #{tpu_custom_call.1} parent=31 // pred_region
          %s1148 = ssub.s32 128, 128
          %1149 = vsyncadd %s1140, %s1148
          %s1150 = sadd.s32 %s30, %s31
          %s1151 = sadd.s32 %s1150, %s29
          %s1152 = smul.addr %s1151, 128
          %s1153 = scalar_lea.hbm %s3, %s1152
          %s1155 = sshll.u32 %s1143, 4
          %s1156 = int_to_ptr.vmem [resolvable:$true] %s1155
          %1158 = dma.vmem_to_hbm [thread:$0]  %s1156, 128, %s1153, %s1140
        $region56: #{tpu_custom_call.1} parent=31 // pred_fallthru
          _
      $region32: #{tpu_custom_call.1} parent=5 // pred_fallthru
        _
      %p1159 = scmp.le.s32.totalorder 2, %s18
      // Predicated region
      $region57: #{tpu_custom_call.1} parent=5 // pred_check
        %p1160 = pneg %p1159
      $region58: #{tpu_custom_call.1} parent=5 // pred_check_branch
        %1162 = sbr.rel (%p1160) target = $region60
      $region59: #{tpu_custom_call.1} parent=5 // pred_region
        %s1163 = ssub.s32 %s18, 2
        // Predicated region
        $region61: #{tpu_custom_call.1} parent=59 // pred_check
          %p1164 = pneg %p167
        $region62: #{tpu_custom_call.1} parent=59 // pred_check_branch
          %1166 = sbr.rel (%p1164) target = $region64
        $region63: #{tpu_custom_call.1} parent=59 // pred_region
          %s1167 = sand.u32 %s152, 1
          %s1168 = scalar_lea.sflag [#allocation7], %s1167
          %s1169 = sand.u32 %s152, 1
          %s1170 = smul.addr %s1169, 8
          %s1171 = scalar_lea.vmem [#allocation11], %s1170
          %1172 = dma.done %s1168, 128
        $region64: #{tpu_custom_call.1} parent=59 // pred_fallthru
          _
      $region60: #{tpu_custom_call.1} parent=5 // pred_fallthru
        _
    $region6: #{tpu_custom_call.1} parent=1 // loop_footer
      %s22 = sadd.s32 1, %s18
    $region7: #{tpu_custom_call.1} parent=1 // loop_footer_branch
      %17 = sbr.rel target = $region3
    $region8: #{tpu_custom_call.1} parent=1 // loop_exit
      _
    %1173 = vsyncpa [#allocation6], 1
    %s1174 = scalar_lea.sflag [#allocation6], 1
    %1175 = vsyncpa %s1174, 1
    %1176 = vsyncpa [#allocation9], 1
    %s1177 = scalar_lea.sflag [#allocation9], 1
    %1178 = vsyncpa %s1177, 1
    %1179 = vsyncpa [#allocation7], 1
    %s1180 = scalar_lea.sflag [#allocation7], 1
    %1181 = vsyncpa %s1180, 1

</llo_original>
